<compile_context>
chip_gen: v7x
topology: tpu7x:2x2x1
jax: 0.10.0
libtpu: 0.0.40
codegen_flags: <defaults>
</compile_context>

<pallas_src>
import math

import jax
import jax.numpy as jnp
from jax.experimental import pallas as pl
from jax.experimental.pallas import tpu as pltpu


LANE = 128      # lane-dense padded width of the final layer's output
SUBLANE = 8     # sublane alignment for the (tiny) input feature dim


def _silu(x):
    # nn.SiLU: x * sigmoid(x)   (the `n_hid` ctor arg only toggles inplace)
    return x * jax.nn.sigmoid(x)


def _round_up(x, m):
    return (x + m - 1) // m * m


def mlp_kernel(h_ref,
               w0_ref, b0_ref,
               w1_ref, b1_ref,
               w2_ref, b2_ref,
               w3_ref, b3_ref,
               w4_ref, b4_ref,
               o_ref):
    """One batch tile of the 5-layer Linear+SiLU stack.

    Activations/weights arrive as bf16 (MXU-friendly); every dot accumulates
    in f32 via preferred_element_type, bias-add + SiLU run in f32, and the
    activation is re-cast to bf16 before the next matmul.
    """
    def layer(h_bf16, w_ref, b_ref, act):
        y = jnp.dot(h_bf16, w_ref[...], preferred_element_type=jnp.float32)
        y = y + b_ref[...]
        return _silu(y) if act else y

    h = h_ref[...]                                  # already bf16
    h = layer(h, w0_ref, b0_ref, True).astype(jnp.bfloat16)
    h = layer(h, w1_ref, b1_ref, True).astype(jnp.bfloat16)
    h = layer(h, w2_ref, b2_ref, True).astype(jnp.bfloat16)
    h = layer(h, w3_ref, b3_ref, True).astype(jnp.bfloat16)
    out = layer(h, w4_ref, b4_ref, False)

    o_ref[...] = out.astype(o_ref.dtype)


def init_mlp_params(key, n_dims=4, n_out=3, n_hid=512, dtype=jnp.float32):
    """Deterministic init mimicking PyTorch nn.Linear default U(-1/sqrt(fan_in), .)."""
    dims = [(n_dims, n_hid), (n_hid, n_hid), (n_hid, n_hid), (n_hid, n_hid),
            (n_hid, n_out)]
    params = []
    for (fan_in, fan_out) in dims:
        key, kw, kb = jax.random.split(key, 3)
        bound = 1.0 / math.sqrt(fan_in)
        # stored as (in, out) so the kernel does h @ W directly
        w = jax.random.uniform(kw, (fan_in, fan_out), dtype,
                               minval=-bound, maxval=bound)
        b = jax.random.uniform(kb, (1, fan_out), dtype,
                               minval=-bound, maxval=bound)
        params.append((w, b))
    return params


def mlp_forward(t, x, params, *, block_b=256):
    """Equivalent of MLP.forward(t, x), tiled over the batch dimension."""
    B = x.shape[0]
    # glue: flatten x, hstack the t column (plain JAX, no hot-path compute)
    h = jnp.concatenate([t.reshape(B, 1).astype(jnp.float32),
                         x.reshape(B, -1).astype(jnp.float32)], axis=1)
    n_dims = h.shape[1]
    n_hid = params[0][0].shape[1]
    n_out = params[-1][0].shape[1]

    # Pad the (tiny) feature dim to a sublane multiple; pad W0's rows to match.
    feat = _round_up(n_dims, SUBLANE)
    if feat != n_dims:
        h = jnp.pad(h, ((0, 0), (0, feat - n_dims)))

    # Batch tile: MXU-sized (256) when B allows, otherwise the (8-aligned) batch.
    bt = min(block_b, _round_up(B, 8))
    padded_b = _round_up(B, bt)
    if padded_b != B:
        h = jnp.pad(h, ((0, padded_b - B), (0, 0)))
    grid = (padded_b // bt,)

    # Feed activations in bf16 (halves input DMA; identical numerics to an
    # in-kernel cast since all matmuls run in bf16 anyway).
    h = h.astype(jnp.bfloat16)

    # Flatten params: bf16 weights, f32 biases; first layer row-padded to
    # `feat`, last layer col-padded to 128 lanes (lane-dense output store).
    flat = []
    flat_specs = []
    for li, (w, b) in enumerate(params):
        if li == 0 and feat != w.shape[0]:
            w = jnp.pad(w, ((0, feat - w.shape[0]), (0, 0)))
        if li == len(params) - 1:
            w = jnp.pad(w, ((0, 0), (0, LANE - w.shape[1])))
            b = jnp.pad(b, ((0, 0), (0, LANE - b.shape[1])))
        w = w.astype(jnp.bfloat16)
        b = b.astype(jnp.float32)
        flat += [w, b]
        # weights/biases stay VMEM-resident across batch tiles (constant index_map)
        flat_specs += [pl.BlockSpec(w.shape, lambda i: (0, 0)),
                       pl.BlockSpec(b.shape, lambda i: (0, 0))]

    weight_bytes = sum(a.size * a.dtype.itemsize for a in flat)
    cost = pl.CostEstimate(
        flops=2 * padded_b * (feat * n_hid + 3 * n_hid * n_hid + n_hid * LANE),
        transcendentals=4 * padded_b * n_hid,
        bytes_accessed=weight_bytes + padded_b * (feat * 2 + LANE * 4),
    )

    out = pl.pallas_call(
        mlp_kernel,
        out_shape=jax.ShapeDtypeStruct((padded_b, LANE), jnp.float32),
        grid=grid,
        in_specs=[pl.BlockSpec((bt, feat), lambda i: (i, 0))] + flat_specs,
        out_specs=pl.BlockSpec((bt, LANE), lambda i: (i, 0)),
        compiler_params=pltpu.CompilerParams(
            dimension_semantics=("parallel",)),
        cost_estimate=cost,
    )(h, *flat)

    return out[:B, :n_out]


def mlp_reference(t, x, params, *, matmul_dtype=jnp.float32):
    """Pure-JAX reference (optionally with the same bf16 matmul path)."""
    B = x.shape[0]
    h = jnp.concatenate([t.reshape(B, 1).astype(jnp.float32),
                         x.reshape(B, -1).astype(jnp.float32)], axis=1)
    for i, (w, b) in enumerate(params):
        y = jnp.dot(h.astype(matmul_dtype), w.astype(matmul_dtype),
                    preferred_element_type=jnp.float32) + b
        h = _silu(y) if i < len(params) - 1 else y
    return h


if __name__ == "__main__":
    key = jax.random.PRNGKey(0)
    k_params, k_t, k_x = jax.random.split(key, 3)

    n_dims, n_out, n_hid = 4, 3, 512
    B = 8

    params = init_mlp_params(k_params, n_dims=n_dims, n_out=n_out, n_hid=n_hid)

    # forward expects hstack([t, x_flat]) to have n_dims columns -> x has n_dims-1 features
    t = jax.random.normal(k_t, (B,), dtype=jnp.float32)
    x = jax.random.normal(k_x, (B, n_dims - 1), dtype=jnp.float32)

    out = mlp_forward(t, x, params)
    out = jax.block_until_ready(out)
    assert out.shape == (B, n_out), out.shape

    # tight check vs a reference using the same bf16-matmul / f32-accumulate path
    ref_bf16 = mlp_reference(t, x, params, matmul_dtype=jnp.bfloat16)
    assert jnp.allclose(out, ref_bf16, atol=1e-3, rtol=1e-3), "mismatch vs bf16 reference"

    # loose check vs the full-f32 module semantics
    ref_f32 = mlp_reference(t, x, params, matmul_dtype=jnp.float32)
    assert jnp.allclose(out, ref_f32, atol=5e-2, rtol=5e-2), "mismatch vs f32 reference"

    print("KERNEL_OK")
</pallas_src>

<mosaic_0001>
module attributes {stable_mosaic.version = 11 : i64} {
  func.func @mlp_kernel(%arg0: i32, %arg1: memref<8x8xbf16, #tpu.memory_space<vmem>>, %arg2: memref<8x512xbf16, #tpu.memory_space<vmem>>, %arg3: memref<1x512xf32, #tpu.memory_space<vmem>>, %arg4: memref<512x512xbf16, #tpu.memory_space<vmem>>, %arg5: memref<1x512xf32, #tpu.memory_space<vmem>>, %arg6: memref<512x512xbf16, #tpu.memory_space<vmem>>, %arg7: memref<1x512xf32, #tpu.memory_space<vmem>>, %arg8: memref<512x512xbf16, #tpu.memory_space<vmem>>, %arg9: memref<1x512xf32, #tpu.memory_space<vmem>>, %arg10: memref<512x128xbf16, #tpu.memory_space<vmem>>, %arg11: memref<1x128xf32, #tpu.memory_space<vmem>>, %arg12: memref<8x128xf32, #tpu.memory_space<vmem>>) attributes {dimension_semantics = [#tpu.dimension_semantics<parallel>], iteration_bounds = array<i64: 1>, scalar_prefetch = 0 : i64, scratch_operands = 0 : i64, tpu.core_type = #tpu.core_type<tc>, window_params = [{transform_indices = @transform_0, window_bounds = array<i64: 8, 8>}, {pipeline_mode = #tpu.pipeline_mode<synchronous>, transform_indices = @transform_1, window_bounds = array<i64: 8, 512>}, {pipeline_mode = #tpu.pipeline_mode<synchronous>, transform_indices = @transform_2, window_bounds = array<i64: 1, 512>}, {pipeline_mode = #tpu.pipeline_mode<synchronous>, transform_indices = @transform_3, window_bounds = array<i64: 512, 512>}, {pipeline_mode = #tpu.pipeline_mode<synchronous>, transform_indices = @transform_4, window_bounds = array<i64: 1, 512>}, {pipeline_mode = #tpu.pipeline_mode<synchronous>, transform_indices = @transform_5, window_bounds = array<i64: 512, 512>}, {pipeline_mode = #tpu.pipeline_mode<synchronous>, transform_indices = @transform_6, window_bounds = array<i64: 1, 512>}, {pipeline_mode = #tpu.pipeline_mode<synchronous>, transform_indices = @transform_7, window_bounds = array<i64: 512, 512>}, {pipeline_mode = #tpu.pipeline_mode<synchronous>, transform_indices = @transform_8, window_bounds = array<i64: 1, 512>}, {pipeline_mode = #tpu.pipeline_mode<synchronous>, transform_indices = @transform_9, window_bounds = array<i64: 512, 128>}, {pipeline_mode = #tpu.pipeline_mode<synchronous>, transform_indices = @transform_10, window_bounds = array<i64: 1, 128>}, {transform_indices = @transform_11, window_bounds = array<i64: 8, 128>}]} {
    %c0 = arith.constant 0 : index
    %c0_0 = arith.constant 0 : index
    %0 = vector.load %arg1[%c0, %c0_0] : memref<8x8xbf16, #tpu.memory_space<vmem>>, vector<8x8xbf16>
    %c0_1 = arith.constant 0 : index
    %c0_2 = arith.constant 0 : index
    %1 = vector.load %arg2[%c0_1, %c0_2] : memref<8x512xbf16, #tpu.memory_space<vmem>>, vector<8x512xbf16>
    %cst = arith.constant dense<0.000000e+00> : vector<8x512xf32>
    %2 = tpu.matmul %0, %1, %cst {dimension_numbers = #tpu.dot_dimension_numbers<[1], [0], [0], [1], [0, 0, 1, 1], [], []>} : vector<8x8xbf16>, vector<8x512xbf16>, vector<8x512xf32> -> vector<8x512xf32>
    %c0_3 = arith.constant 0 : index
    %c0_4 = arith.constant 0 : index
    %3 = vector.load %arg3[%c0_3, %c0_4] : memref<1x512xf32, #tpu.memory_space<vmem>>, vector<1x512xf32>
    %4 = vector.broadcast %3 : vector<1x512xf32> to vector<8x512xf32>
    %5 = arith.addf %2, %4 : vector<8x512xf32>
    %6 = arith.negf %5 : vector<8x512xf32>
    %7 = math.exp %6 : vector<8x512xf32>
    %cst_5 = arith.constant 1.000000e+00 : f32
    %8 = vector.broadcast %cst_5 : f32 to vector<8x512xf32>
    %9 = arith.addf %8, %7 : vector<8x512xf32>
    %10 = arith.divf %8, %9 : vector<8x512xf32>
    %11 = arith.mulf %5, %10 : vector<8x512xf32>
    %12 = arith.truncf %11 : vector<8x512xf32> to vector<8x512xbf16>
    %c0_6 = arith.constant 0 : index
    %c0_7 = arith.constant 0 : index
    %13 = vector.load %arg4[%c0_6, %c0_7] : memref<512x512xbf16, #tpu.memory_space<vmem>>, vector<512x512xbf16>
    %cst_8 = arith.constant dense<0.000000e+00> : vector<8x512xf32>
    %14 = tpu.matmul %12, %13, %cst_8 {dimension_numbers = #tpu.dot_dimension_numbers<[1], [0], [0], [1], [0, 0, 1, 1], [], []>} : vector<8x512xbf16>, vector<512x512xbf16>, vector<8x512xf32> -> vector<8x512xf32>
    %c0_9 = arith.constant 0 : index
    %c0_10 = arith.constant 0 : index
    %15 = vector.load %arg5[%c0_9, %c0_10] : memref<1x512xf32, #tpu.memory_space<vmem>>, vector<1x512xf32>
    %16 = vector.broadcast %15 : vector<1x512xf32> to vector<8x512xf32>
    %17 = arith.addf %14, %16 : vector<8x512xf32>
    %18 = arith.negf %17 : vector<8x512xf32>
    %19 = math.exp %18 : vector<8x512xf32>
    %cst_11 = arith.constant 1.000000e+00 : f32
    %20 = vector.broadcast %cst_11 : f32 to vector<8x512xf32>
    %21 = arith.addf %20, %19 : vector<8x512xf32>
    %22 = arith.divf %20, %21 : vector<8x512xf32>
    %23 = arith.mulf %17, %22 : vector<8x512xf32>
    %24 = arith.truncf %23 : vector<8x512xf32> to vector<8x512xbf16>
    %c0_12 = arith.constant 0 : index
    %c0_13 = arith.constant 0 : index
    %25 = vector.load %arg6[%c0_12, %c0_13] : memref<512x512xbf16, #tpu.memory_space<vmem>>, vector<512x512xbf16>
    %cst_14 = arith.constant dense<0.000000e+00> : vector<8x512xf32>
    %26 = tpu.matmul %24, %25, %cst_14 {dimension_numbers = #tpu.dot_dimension_numbers<[1], [0], [0], [1], [0, 0, 1, 1], [], []>} : vector<8x512xbf16>, vector<512x512xbf16>, vector<8x512xf32> -> vector<8x512xf32>
    %c0_15 = arith.constant 0 : index
    %c0_16 = arith.constant 0 : index
    %27 = vector.load %arg7[%c0_15, %c0_16] : memref<1x512xf32, #tpu.memory_space<vmem>>, vector<1x512xf32>
    %28 = vector.broadcast %27 : vector<1x512xf32> to vector<8x512xf32>
    %29 = arith.addf %26, %28 : vector<8x512xf32>
    %30 = arith.negf %29 : vector<8x512xf32>
    %31 = math.exp %30 : vector<8x512xf32>
    %cst_17 = arith.constant 1.000000e+00 : f32
    %32 = vector.broadcast %cst_17 : f32 to vector<8x512xf32>
    %33 = arith.addf %32, %31 : vector<8x512xf32>
    %34 = arith.divf %32, %33 : vector<8x512xf32>
    %35 = arith.mulf %29, %34 : vector<8x512xf32>
    %36 = arith.truncf %35 : vector<8x512xf32> to vector<8x512xbf16>
    %c0_18 = arith.constant 0 : index
    %c0_19 = arith.constant 0 : index
    %37 = vector.load %arg8[%c0_18, %c0_19] : memref<512x512xbf16, #tpu.memory_space<vmem>>, vector<512x512xbf16>
    %cst_20 = arith.constant dense<0.000000e+00> : vector<8x512xf32>
    %38 = tpu.matmul %36, %37, %cst_20 {dimension_numbers = #tpu.dot_dimension_numbers<[1], [0], [0], [1], [0, 0, 1, 1], [], []>} : vector<8x512xbf16>, vector<512x512xbf16>, vector<8x512xf32> -> vector<8x512xf32>
    %c0_21 = arith.constant 0 : index
    %c0_22 = arith.constant 0 : index
    %39 = vector.load %arg9[%c0_21, %c0_22] : memref<1x512xf32, #tpu.memory_space<vmem>>, vector<1x512xf32>
    %40 = vector.broadcast %39 : vector<1x512xf32> to vector<8x512xf32>
    %41 = arith.addf %38, %40 : vector<8x512xf32>
    %42 = arith.negf %41 : vector<8x512xf32>
    %43 = math.exp %42 : vector<8x512xf32>
    %cst_23 = arith.constant 1.000000e+00 : f32
    %44 = vector.broadcast %cst_23 : f32 to vector<8x512xf32>
    %45 = arith.addf %44, %43 : vector<8x512xf32>
    %46 = arith.divf %44, %45 : vector<8x512xf32>
    %47 = arith.mulf %41, %46 : vector<8x512xf32>
    %48 = arith.truncf %47 : vector<8x512xf32> to vector<8x512xbf16>
    %c0_24 = arith.constant 0 : index
    %c0_25 = arith.constant 0 : index
    %49 = vector.load %arg10[%c0_24, %c0_25] : memref<512x128xbf16, #tpu.memory_space<vmem>>, vector<512x128xbf16>
    %cst_26 = arith.constant dense<0.000000e+00> : vector<8x128xf32>
    %50 = tpu.matmul %48, %49, %cst_26 {dimension_numbers = #tpu.dot_dimension_numbers<[1], [0], [0], [1], [0, 0, 1, 1], [], []>} : vector<8x512xbf16>, vector<512x128xbf16>, vector<8x128xf32> -> vector<8x128xf32>
    %c0_27 = arith.constant 0 : index
    %c0_28 = arith.constant 0 : index
    %51 = vector.load %arg11[%c0_27, %c0_28] : memref<1x128xf32, #tpu.memory_space<vmem>>, vector<1x128xf32>
    %52 = vector.broadcast %51 : vector<1x128xf32> to vector<8x128xf32>
    %53 = arith.addf %50, %52 : vector<8x128xf32>
    %c0_29 = arith.constant 0 : index
    %c0_30 = arith.constant 0 : index
    %54 = vector.load %arg12[%c0_29, %c0_30] : memref<8x128xf32, #tpu.memory_space<vmem>>, vector<8x128xf32>
    tpu.vector_store %arg12[%c0_29, %c0_30], %53 {strides = array<i32>} : memref<8x128xf32, #tpu.memory_space<vmem>>, vector<8x128xf32>,
    return
  }
  func.func @transform_0(%arg0: i32) -> (i32, i32) {
    %c0_i32 = arith.constant 0 : i32
    %c0_i32_0 = arith.constant 0 : i32
    return %arg0, %c0_i32 : i32, i32
  }
  func.func @transform_1(%arg0: i32) -> (i32, i32) {
    %c0_i32 = arith.constant 0 : i32
    %c0_i32_0 = arith.constant 0 : i32
    %c0_i32_1 = arith.constant 0 : i32
    return %c0_i32, %c0_i32_0 : i32, i32
  }
  func.func @transform_2(%arg0: i32) -> (i32, i32) {
    %c0_i32 = arith.constant 0 : i32
    %c0_i32_0 = arith.constant 0 : i32
    %c0_i32_1 = arith.constant 0 : i32
    return %c0_i32, %c0_i32_0 : i32, i32
  }
  func.func @transform_3(%arg0: i32) -> (i32, i32) {
    %c0_i32 = arith.constant 0 : i32
    %c0_i32_0 = arith.constant 0 : i32
    %c0_i32_1 = arith.constant 0 : i32
    return %c0_i32, %c0_i32_0 : i32, i32
  }
  func.func @transform_4(%arg0: i32) -> (i32, i32) {
    %c0_i32 = arith.constant 0 : i32
    %c0_i32_0 = arith.constant 0 : i32
    %c0_i32_1 = arith.constant 0 : i32
    return %c0_i32, %c0_i32_0 : i32, i32
  }
  func.func @transform_5(%arg0: i32) -> (i32, i32) {
    %c0_i32 = arith.constant 0 : i32
    %c0_i32_0 = arith.constant 0 : i32
    %c0_i32_1 = arith.constant 0 : i32
    return %c0_i32, %c0_i32_0 : i32, i32
  }
  func.func @transform_6(%arg0: i32) -> (i32, i32) {
    %c0_i32 = arith.constant 0 : i32
    %c0_i32_0 = arith.constant 0 : i32
    %c0_i32_1 = arith.constant 0 : i32
    return %c0_i32, %c0_i32_0 : i32, i32
  }
  func.func @transform_7(%arg0: i32) -> (i32, i32) {
    %c0_i32 = arith.constant 0 : i32
    %c0_i32_0 = arith.constant 0 : i32
    %c0_i32_1 = arith.constant 0 : i32
    return %c0_i32, %c0_i32_0 : i32, i32
  }
  func.func @transform_8(%arg0: i32) -> (i32, i32) {
    %c0_i32 = arith.constant 0 : i32
    %c0_i32_0 = arith.constant 0 : i32
    %c0_i32_1 = arith.constant 0 : i32
    return %c0_i32, %c0_i32_0 : i32, i32
  }
  func.func @transform_9(%arg0: i32) -> (i32, i32) {
    %c0_i32 = arith.constant 0 : i32
    %c0_i32_0 = arith.constant 0 : i32
    %c0_i32_1 = arith.constant 0 : i32
    return %c0_i32, %c0_i32_0 : i32, i32
  }
  func.func @transform_10(%arg0: i32) -> (i32, i32) {
    %c0_i32 = arith.constant 0 : i32
    %c0_i32_0 = arith.constant 0 : i32
    %c0_i32_1 = arith.constant 0 : i32
    return %c0_i32, %c0_i32_0 : i32, i32
  }
  func.func @transform_11(%arg0: i32) -> (i32, i32) {
    %c0_i32 = arith.constant 0 : i32
    %c0_i32_0 = arith.constant 0 : i32
    return %arg0, %c0_i32 : i32, i32
  }
}

</mosaic_0001>

<llo_original>
// kernel: tpu_custom_call.1
$region0: #{tpu_custom_call.1}
  #allocation0 [shape = 'u32[]', space=smem, size = 0x4, offset = 0x4, fixed_abs, tag = 'smem constant byte address 0x4 - core index']
  #allocation1 [shape = 'u32[144,128]{1,0:T(1,128)}', space=vmem, size = 0x12000, scoped, tag = 'internal scratch']
  %s0 = inlined_call_operand.hbm [shape: bf16[8,8], index: 0, kind: input, shape index: {}]
  %s1 = inlined_call_operand.hbm [shape: bf16[8,512], index: 1, kind: input, shape index: {}]
  %s2 = inlined_call_operand.vmem [shape: f32[1,512], index: 2, kind: input, shape index: {}]
  %s3 = inlined_call_operand.hbm [shape: bf16[512,512], index: 3, kind: input, shape index: {}]
  %s4 = inlined_call_operand.vmem [shape: f32[1,512], index: 4, kind: input, shape index: {}]
  %s5 = inlined_call_operand.hbm [shape: bf16[512,512], index: 5, kind: input, shape index: {}]
  %s6 = inlined_call_operand.vmem [shape: f32[1,512], index: 6, kind: input, shape index: {}]
  %s7 = inlined_call_operand.hbm [shape: bf16[512,512], index: 7, kind: input, shape index: {}]
  %s8 = inlined_call_operand.vmem [shape: f32[1,512], index: 8, kind: input, shape index: {}]
  %s9 = inlined_call_operand.hbm [shape: bf16[512,128], index: 9, kind: input, shape index: {}]
  %s10 = inlined_call_operand.vmem [shape: f32[1,128], index: 10, kind: input, shape index: {}]
  %s11 = inlined_call_operand.hbm [shape: f32[8,128], index: 11, kind: output, shape index: {}]
  %s12 = sld [smem:[#allocation0]]
  $region78: #{tpu_custom_call.1} parent=0
    _
  %s14 = ssub.s32 1, %s12
  %s15 = scalar_select 0, %s14, %s12
  $region1: #{tpu_custom_call.1} parent=0
    #allocation2 [shape = 'u8[2048]{0}', space=vmem, size = 0x800, scoped, tag = 'input window, operand 0, single buffered']
    #allocation3 [shape = 's32[1]{0}', space=sflag, size = 0x4, scoped, tag = 'scoped memory for tpu_custom_call.1']
    #allocation4 [shape = 's32[1]{0}', space=sflag, size = 0x4, scoped, tag = 'scoped memory for tpu_custom_call.1']
    #allocation5 [shape = 'u8[8192]{0}', space=vmem, size = 0x2000, scoped, tag = 'input window, operand 1, single buffered']
    #allocation6 [shape = 's32[1]{0}', space=sflag, size = 0x4, scoped, tag = 'scoped memory for tpu_custom_call.1']
    #allocation7 [shape = 'u8[524288]{0}', space=vmem, size = 0x80000, scoped, tag = 'input window, operand 3, single buffered']
    #allocation8 [shape = 'u8[524288]{0}', space=vmem, size = 0x80000, scoped, tag = 'input window, operand 5, single buffered']
    #allocation9 [shape = 's32[1]{0}', space=sflag, size = 0x4, scoped, tag = 'scoped memory for tpu_custom_call.1']
    #allocation10 [shape = 'u8[524288]{0}', space=vmem, size = 0x80000, scoped, tag = 'input window, operand 7, single buffered']
    #allocation11 [shape = 'u8[131072]{0}', space=vmem, size = 0x20000, scoped, tag = 'input window, operand 9, single buffered']
    #allocation12 [shape = 's32[1]{0}', space=sflag, size = 0x4, scoped, tag = 'scoped memory for tpu_custom_call.1']
    #allocation13 [shape = 'u8[4096]{0}', space=vmem, size = 0x1000, scoped, tag = 'output window, operand 0, single buffered']
    %16 = vsyncpa [#allocation3], 0
    %17 = vsyncpa [#allocation6], 0
    %18 = vsyncpa [#allocation9], 0
    %19 = vsyncpa [#allocation12], 0
    %20 = vsyncpa [#allocation4], 0
    // Predicated region
    $region2: #{tpu_custom_call.1} parent=1 // pred_check
      _
    $region3: #{tpu_custom_call.1} parent=1 // pred_check_branch
      %22 = sbr.rel (0) target = $region5
    $region4: #{tpu_custom_call.1} parent=1 // pred_region
      %s24 = ssub.s32 64, 64
      %25 = vsyncadd [#allocation3], %s24
      %s27 = sshll.u32 [#allocation2], 4
      %s28 = int_to_ptr.vmem [resolvable:$true] %s27
      %30 = dma.hbm_to_vmem [thread:$0]  %s0, 64, %s28, [#allocation3]
    $region5: #{tpu_custom_call.1} parent=1 // pred_fallthru
      _
    // Predicated region
    $region6: #{tpu_custom_call.1} parent=1 // pred_check
      _
    $region7: #{tpu_custom_call.1} parent=1 // pred_check_branch
      %32 = sbr.rel (0) target = $region9
    $region8: #{tpu_custom_call.1} parent=1 // pred_region
      %s34 = ssub.s32 256, 256
      %35 = vsyncadd [#allocation6], %s34
      %s37 = sshll.u32 [#allocation5], 4
      %s38 = int_to_ptr.vmem [resolvable:$true] %s37
      %40 = dma.hbm_to_vmem [thread:$0]  %s1, 256, %s38, [#allocation6]
    $region9: #{tpu_custom_call.1} parent=1 // pred_fallthru
      _
    // Predicated region
    $region10: #{tpu_custom_call.1} parent=1 // pred_check
      _
    $region11: #{tpu_custom_call.1} parent=1 // pred_check_branch
      %42 = sbr.rel (0) target = $region13
    $region12: #{tpu_custom_call.1} parent=1 // pred_region
      _
    $region13: #{tpu_custom_call.1} parent=1 // pred_fallthru
      _
    // Predicated region
    $region14: #{tpu_custom_call.1} parent=1 // pred_check
      _
    $region15: #{tpu_custom_call.1} parent=1 // pred_check_branch
      %44 = sbr.rel (0) target = $region17
    $region16: #{tpu_custom_call.1} parent=1 // pred_region
      %s46 = ssub.s32 16384, 16384
      %47 = vsyncadd [#allocation6], %s46
      %s48 = sshll.u32 [#allocation7], 4
      %s49 = int_to_ptr.vmem [resolvable:$true] %s48
      %54 = dma.hbm_to_vmem [thread:$0]  %s3, 16384, %s49, [#allocation6], 256, 256, 16
    $region17: #{tpu_custom_call.1} parent=1 // pred_fallthru
      _
    // Predicated region
    $region18: #{tpu_custom_call.1} parent=1 // pred_check
      _
    $region19: #{tpu_custom_call.1} parent=1 // pred_check_branch
      %56 = sbr.rel (0) target = $region21
    $region20: #{tpu_custom_call.1} parent=1 // pred_region
      _
    $region21: #{tpu_custom_call.1} parent=1 // pred_fallthru
      _
    // Predicated region
    $region22: #{tpu_custom_call.1} parent=1 // pred_check
      _
    $region23: #{tpu_custom_call.1} parent=1 // pred_check_branch
      %58 = sbr.rel (0) target = $region25
    $region24: #{tpu_custom_call.1} parent=1 // pred_region
      %s60 = ssub.s32 16384, 16384
      %61 = vsyncadd [#allocation9], %s60
      %s62 = sshll.u32 [#allocation8], 4
      %s63 = int_to_ptr.vmem [resolvable:$true] %s62
      %68 = dma.hbm_to_vmem [thread:$0]  %s5, 16384, %s63, [#allocation9], 256, 256, 16
    $region25: #{tpu_custom_call.1} parent=1 // pred_fallthru
      _
    // Predicated region
    $region26: #{tpu_custom_call.1} parent=1 // pred_check
      _
    $region27: #{tpu_custom_call.1} parent=1 // pred_check_branch
      %70 = sbr.rel (0) target = $region29
    $region28: #{tpu_custom_call.1} parent=1 // pred_region
      _
    $region29: #{tpu_custom_call.1} parent=1 // pred_fallthru
      _
    // Predicated region
    $region30: #{tpu_custom_call.1} parent=1 // pred_check
      _
    $region31: #{tpu_custom_call.1} parent=1 // pred_check_branch
      %72 = sbr.rel (0) target = $region33
    $region32: #{tpu_custom_call.1} parent=1 // pred_region
      %s74 = ssub.s32 16384, 16384
      %75 = vsyncadd [#allocation9], %s74
      %s76 = sshll.u32 [#allocation10], 4
      %s77 = int_to_ptr.vmem [resolvable:$true] %s76
      %82 = dma.hbm_to_vmem [thread:$0]  %s7, 16384, %s77, [#allocation9], 256, 256, 16
    $region33: #{tpu_custom_call.1} parent=1 // pred_fallthru
      _
    // Predicated region
    $region34: #{tpu_custom_call.1} parent=1 // pred_check
      _
    $region35: #{tpu_custom_call.1} parent=1 // pred_check_branch
      %84 = sbr.rel (0) target = $region37
    $region36: #{tpu_custom_call.1} parent=1 // pred_region
      _
    $region37: #{tpu_custom_call.1} parent=1 // pred_fallthru
      _
    // Predicated region
    $region38: #{tpu_custom_call.1} parent=1 // pred_check
      _
    $region39: #{tpu_custom_call.1} parent=1 // pred_check_branch
      %86 = sbr.rel (0) target = $region41
    $region40: #{tpu_custom_call.1} parent=1 // pred_region
      %s88 = ssub.s32 4096, 4096
      %89 = vsyncadd [#allocation12], %s88
      %s90 = sshll.u32 [#allocation11], 4
      %s91 = int_to_ptr.vmem [resolvable:$true] %s90
      %96 = dma.hbm_to_vmem [thread:$0]  %s9, 4096, %s91, [#allocation12], 64, 64, 4
    $region41: #{tpu_custom_call.1} parent=1 // pred_fallthru
      _
    // Predicated region
    $region42: #{tpu_custom_call.1} parent=1 // pred_check
      _
    $region43: #{tpu_custom_call.1} parent=1 // pred_check_branch
      %98 = sbr.rel (0) target = $region45
    $region44: #{tpu_custom_call.1} parent=1 // pred_region
      _
    $region45: #{tpu_custom_call.1} parent=1 // pred_fallthru
      _
    // Predicated region
    $region46: #{tpu_custom_call.1} parent=1 // pred_check
      _
    $region47: #{tpu_custom_call.1} parent=1 // pred_check_branch
      %100 = sbr.rel (0) target = $region49
    $region48: #{tpu_custom_call.1} parent=1 // pred_region
      %101 = dma.done [#allocation3], 64
    $region49: #{tpu_custom_call.1} parent=1 // pred_fallthru
      _
    // Predicated region
    $region50: #{tpu_custom_call.1} parent=1 // pred_check
      _
    $region51: #{tpu_custom_call.1} parent=1 // pred_check_branch
      %103 = sbr.rel (0) target = $region53
    $region52: #{tpu_custom_call.1} parent=1 // pred_region
      %104 = dma.done [#allocation6], 256
    $region53: #{tpu_custom_call.1} parent=1 // pred_fallthru
      _
    // Predicated region
    $region54: #{tpu_custom_call.1} parent=1 // pred_check
      _
    $region55: #{tpu_custom_call.1} parent=1 // pred_check_branch
      %106 = sbr.rel (0) target = $region57
    $region56: #{tpu_custom_call.1} parent=1 // pred_region
      %107 = dma.done [#allocation6], 16384
    $region57: #{tpu_custom_call.1} parent=1 // pred_fallthru
      _
    // Predicated region
    $region58: #{tpu_custom_call.1} parent=1 // pred_check
      _
    $region59: #{tpu_custom_call.1} parent=1 // pred_check_branch
      %109 = sbr.rel (0) target = $region61
    $region60: #{tpu_custom_call.1} parent=1 // pred_region
      %110 = dma.done [#allocation9], 16384
    $region61: #{tpu_custom_call.1} parent=1 // pred_fallthru
      _
    // Predicated region
    $region62: #{tpu_custom_call.1} parent=1 // pred_check
      _
    $region63: #{tpu_custom_call.1} parent=1 // pred_check_branch
      %112 = sbr.rel (0) target = $region65
    $region64: #{tpu_custom_call.1} parent=1 // pred_region
      %113 = dma.done [#allocation9], 16384
    $region65: #{tpu_custom_call.1} parent=1 // pred_fallthru
      _
    // Predicated region
    $region66: #{tpu_custom_call.1} parent=1 // pred_check
      _
    $region67: #{tpu_custom_call.1} parent=1 // pred_check_branch
      %115 = sbr.rel (0) target = $region69
    $region68: #{tpu_custom_call.1} parent=1 // pred_region
      %116 = dma.done [#allocation12], 4096
    $region69: #{tpu_custom_call.1} parent=1 // pred_fallthru
      _
    %v118 = vld [vmem:[#allocation2] sm:$0xf]
    %v119 = vld [vmem:[#allocation5] sm:$0xff]
    %v120 = vld [vmem:[#allocation5 + $0x8] sm:$0xff]
    %v121 = vld [vmem:[%s2] sm:$0xf]
    %v123 = vlaneseq
    %v124 = vshrl.u32 %v123, 7
    %v125 = vsub.s32 0, %v124
    %v126 = vrot.slane %v121, %v125
    %v127 = vlaneseq
    %v128 = vshrl.u32 %v127, 7
    %v129 = vsub.s32 1, %v128
    %v130 = vrot.slane %v121, %v129
    %v131 = vlaneseq
    %v132 = vshrl.u32 %v131, 7
    %v133 = vsub.s32 2, %v132
    %v134 = vrot.slane %v121, %v133
    %v135 = vlaneseq
    %v136 = vshrl.u32 %v135, 7
    %v137 = vsub.s32 3, %v136
    %v138 = vrot.slane %v121, %v137
    %v145 = vunpack.c.l.b16 %v119
    %v146 = vunpack.c.h.b16 %v119
    %v147 = vunpack.c.l.b16 %v120
    %v148 = vunpack.c.h.b16 %v120
    %v149 = vpack.c.b16 %v145, %v145
    %v150 = vpack.c.b16 %v146, %v146
    %v151 = vpack.c.b16 %v147, %v147
    %v152 = vpack.c.b16 %v148, %v148
    %vm153 = vcmask 64512
    %v155 = vsel %vm153, %v118, 0
    %vm157 = vcmask 1043456
    %v159 = vsel %vm157, %v149, 0
    %v162 = vsel %vm157, %v150, 0
    %v165 = vsel %vm157, %v151, 0
    %v168 = vsel %vm157, %v152, 0
    %170 = vmatprep.subr.bf16.mxu0 %v162
    %171 = vmatpush1.bf16.msra.mxu0 %v159
    %172 = vmatprep.subr.bf16.mxu0 0
    %173 = vmatpush1.bf16.msra.mxu0 0
    %174 = vmatprep.subr.bf16.mxu0 0
    %175 = vmatpush1.bf16.msra.mxu0 0
    %176 = vmatprep.subr.bf16.mxu0 0
    %177 = vmatpush1.bf16.msra.mxu0 0
    %178 = vmatprep.subr.bf16.mxu0 0
    %179 = vmatpush1.bf16.msra.mxu0 0
    %180 = vmatprep.subr.bf16.mxu0 0
    %181 = vmatpush1.bf16.msra.mxu0 0
    %182 = vmatprep.subr.bf16.mxu0 0
    %183 = vmatpush1.bf16.msra.mxu0 0
    %184 = vmatprep.subr.bf16.mxu0 0
    %185 = vmatpush1.bf16.msra.mxu0 0
    %186 = vmatprep.subr.bf16.mxu0 0
    %187 = vmatpush1.bf16.msra.mxu0 0
    %188 = vmatprep.subr.bf16.mxu0 0
    %189 = vmatpush1.bf16.msra.mxu0 0
    %190 = vmatprep.subr.bf16.mxu0 0
    %191 = vmatpush1.bf16.msra.mxu0 0
    %192 = vmatprep.subr.bf16.mxu0 0
    %193 = vmatpush1.bf16.msra.mxu0 0
    %194 = vmatprep.subr.bf16.mxu0 0
    %195 = vmatpush1.bf16.msra.mxu0 0
    %196 = vmatprep.subr.bf16.mxu0 0
    %197 = vmatpush1.bf16.msra.mxu0 0
    %198 = vmatprep.subr.bf16.mxu0 0
    %199 = vmatpush1.bf16.msra.mxu0 0
    %200 = vmatprep.subr.bf16.mxu0 0
    %201 = vmatpush1.bf16.msra.mxu0 0
    %202 = vmatprep.mubr.bf16.mxu0 0
    %203 = vmatmul.mubr.bf16.gmra.mrb[0].mxu0 %v155
    %v204 = vpop.f32.mrb[0].mxu0
    %v205 = vadd.f32 %v126, %v204
    %v206 = vpop.f32.mrb[0].mxu0
    %v207 = vadd.f32 %v130, %v206
    %v208 = vpop.f32.mrb[0].mxu0
    %v209 = vpop.f32.mrb[0].mxu0
    %210 = vdwg.mxu0
    %211 = vmatprep.subr.bf16.mxu0 %v168
    %212 = vmatpush1.bf16.msra.mxu0 %v165
    %213 = vmatprep.subr.bf16.mxu0 0
    %214 = vmatpush1.bf16.msra.mxu0 0
    %215 = vmatprep.subr.bf16.mxu0 0
    %216 = vmatpush1.bf16.msra.mxu0 0
    %217 = vmatprep.subr.bf16.mxu0 0
    %218 = vmatpush1.bf16.msra.mxu0 0
    %219 = vmatprep.subr.bf16.mxu0 0
    %220 = vmatpush1.bf16.msra.mxu0 0
    %221 = vmatprep.subr.bf16.mxu0 0
    %222 = vmatpush1.bf16.msra.mxu0 0
    %223 = vmatprep.subr.bf16.mxu0 0
    %224 = vmatpush1.bf16.msra.mxu0 0
    %225 = vmatprep.subr.bf16.mxu0 0
    %226 = vmatpush1.bf16.msra.mxu0 0
    %227 = vmatprep.subr.bf16.mxu0 0
    %228 = vmatpush1.bf16.msra.mxu0 0
    %229 = vmatprep.subr.bf16.mxu0 0
    %230 = vmatpush1.bf16.msra.mxu0 0
    %231 = vmatprep.subr.bf16.mxu0 0
    %232 = vmatpush1.bf16.msra.mxu0 0
    %233 = vmatprep.subr.bf16.mxu0 0
    %234 = vmatpush1.bf16.msra.mxu0 0
    %235 = vmatprep.subr.bf16.mxu0 0
    %236 = vmatpush1.bf16.msra.mxu0 0
    %237 = vmatprep.subr.bf16.mxu0 0
    %238 = vmatpush1.bf16.msra.mxu0 0
    %239 = vmatprep.subr.bf16.mxu0 0
    %240 = vmatpush1.bf16.msra.mxu0 0
    %241 = vmatprep.subr.bf16.mxu0 0
    %242 = vmatpush1.bf16.msra.mxu0 0
    %243 = vmatprep.mubr.bf16.mxu0 0
    %244 = vmatmul.mubr.bf16.gmra.mrb[0].mxu0 %v155
    %v245 = vpop.f32.mrb[0].mxu0
    %v246 = vadd.f32 %v134, %v245
    %v247 = vpop.f32.mrb[0].mxu0
    %v248 = vadd.f32 %v138, %v247
    %v249 = vpop.f32.mrb[0].mxu0
    %v250 = vpop.f32.mrb[0].mxu0
    %251 = vdwg.mxu0
    %v252 = vxor.u32 %v205, 2147483648
    %v253 = vxor.u32 %v207, 2147483648
    %v254 = vxor.u32 %v246, 2147483648
    %v255 = vxor.u32 %v248, 2147483648
    %v256 = vmul.f32 %v252, 1.442695
    %v257 = vpow.pop %v256
    %v258 = vmul.f32 %v253, 1.442695
    %v259 = vpow.pop %v258
    %v260 = vmul.f32 %v254, 1.442695
    %v261 = vpow.pop %v260
    %v262 = vmul.f32 %v255, 1.442695
    %v263 = vpow.pop %v262
    %v264 = vadd.f32 %v257, 1.0
    %v265 = vadd.f32 %v259, 1.0
    %v266 = vadd.f32 %v261, 1.0
    %v267 = vadd.f32 %v263, 1.0
    %v268 = vrcp.pop %v264
    %v269 = vmul.f32 1.0, %v268
    %v270 = vrcp.pop %v265
    %v271 = vmul.f32 1.0, %v270
    %v272 = vrcp.pop %v266
    %v273 = vmul.f32 1.0, %v272
    %v274 = vrcp.pop %v267
    %v275 = vmul.f32 1.0, %v274
    %v276 = vmul.f32 %v205, %v269
    %v277 = vmul.f32 %v207, %v271
    %v278 = vmul.f32 %v246, %v273
    %v279 = vmul.f32 %v248, %v275
    %v280 = vpack.c.bf16 %v276, %v276
    %v281 = vpack.c.bf16 %v277, %v277
    %v282 = vpack.c.bf16 %v278, %v278
    %v283 = vpack.c.bf16 %v279, %v279
    %v284 = vld [vmem:[#allocation7] sm:$0xff]
    %v285 = vld [vmem:[#allocation7 + $0x8] sm:$0xff]
    %v286 = vld [vmem:[#allocation7 + $0x10] sm:$0xff]
    %v287 = vld [vmem:[#allocation7 + $0x18] sm:$0xff]
    %v288 = vld [vmem:[#allocation7 + $0x20] sm:$0xff]
    %v289 = vld [vmem:[#allocation7 + $0x28] sm:$0xff]
    %v290 = vld [vmem:[#allocation7 + $0x30] sm:$0xff]
    %v291 = vld [vmem:[#allocation7 + $0x38] sm:$0xff]
    %v292 = vld [vmem:[#allocation7 + $0x40] sm:$0xff]
    %v293 = vld [vmem:[#allocation7 + $0x48] sm:$0xff]
    %v294 = vld [vmem:[#allocation7 + $0x50] sm:$0xff]
    %v295 = vld [vmem:[#allocation7 + $0x58] sm:$0xff]
    %v296 = vld [vmem:[#allocation7 + $0x60] sm:$0xff]
    %v297 = vld [vmem:[#allocation7 + $0x68] sm:$0xff]
    %v298 = vld [vmem:[#allocation7 + $0x70] sm:$0xff]
    %v299 = vld [vmem:[#allocation7 + $0x78] sm:$0xff]
    %v300 = vld [vmem:[#allocation7 + $0x80] sm:$0xff]
    %v301 = vld [vmem:[#allocation7 + $0x88] sm:$0xff]
    %v302 = vld [vmem:[#allocation7 + $0x90] sm:$0xff]
    %v303 = vld [vmem:[#allocation7 + $0x98] sm:$0xff]
    %v304 = vld [vmem:[#allocation7 + $0xa0] sm:$0xff]
    %v305 = vld [vmem:[#allocation7 + $0xa8] sm:$0xff]
    %v306 = vld [vmem:[#allocation7 + $0xb0] sm:$0xff]
    %v307 = vld [vmem:[#allocation7 + $0xb8] sm:$0xff]
    %v308 = vld [vmem:[#allocation7 + $0xc0] sm:$0xff]
    %v309 = vld [vmem:[#allocation7 + $0xc8] sm:$0xff]
    %v310 = vld [vmem:[#allocation7 + $0xd0] sm:$0xff]
    %v311 = vld [vmem:[#allocation7 + $0xd8] sm:$0xff]
    %v312 = vld [vmem:[#allocation7 + $0xe0] sm:$0xff]
    %v313 = vld [vmem:[#allocation7 + $0xe8] sm:$0xff]
    %v314 = vld [vmem:[#allocation7 + $0xf0] sm:$0xff]
    %v315 = vld [vmem:[#allocation7 + $0xf8] sm:$0xff]
    %v316 = vld [vmem:[#allocation7 + $0x100] sm:$0xff]
    %v317 = vld [vmem:[#allocation7 + $0x108] sm:$0xff]
    %v318 = vld [vmem:[#allocation7 + $0x110] sm:$0xff]
    %v319 = vld [vmem:[#allocation7 + $0x118] sm:$0xff]
    %v320 = vld [vmem:[#allocation7 + $0x120] sm:$0xff]
    %v321 = vld [vmem:[#allocation7 + $0x128] sm:$0xff]
    %v322 = vld [vmem:[#allocation7 + $0x130] sm:$0xff]
    %v323 = vld [vmem:[#allocation7 + $0x138] sm:$0xff]
    %v324 = vld [vmem:[#allocation7 + $0x140] sm:$0xff]
    %v325 = vld [vmem:[#allocation7 + $0x148] sm:$0xff]
    %v326 = vld [vmem:[#allocation7 + $0x150] sm:$0xff]
    %v327 = vld [vmem:[#allocation7 + $0x158] sm:$0xff]
    %v328 = vld [vmem:[#allocation7 + $0x160] sm:$0xff]
    %v329 = vld [vmem:[#allocation7 + $0x168] sm:$0xff]
    %v330 = vld [vmem:[#allocation7 + $0x170] sm:$0xff]
    %v331 = vld [vmem:[#allocation7 + $0x178] sm:$0xff]
    %v332 = vld [vmem:[#allocation7 + $0x180] sm:$0xff]
    %v333 = vld [vmem:[#allocation7 + $0x188] sm:$0xff]
    %v334 = vld [vmem:[#allocation7 + $0x190] sm:$0xff]
    %v335 = vld [vmem:[#allocation7 + $0x198] sm:$0xff]
    %v336 = vld [vmem:[#allocation7 + $0x1a0] sm:$0xff]
    %v337 = vld [vmem:[#allocation7 + $0x1a8] sm:$0xff]
    %v338 = vld [vmem:[#allocation7 + $0x1b0] sm:$0xff]
    %v339 = vld [vmem:[#allocation7 + $0x1b8] sm:$0xff]
    %v340 = vld [vmem:[#allocation7 + $0x1c0] sm:$0xff]
    %v341 = vld [vmem:[#allocation7 + $0x1c8] sm:$0xff]
    %v342 = vld [vmem:[#allocation7 + $0x1d0] sm:$0xff]
    %v343 = vld [vmem:[#allocation7 + $0x1d8] sm:$0xff]
    %v344 = vld [vmem:[#allocation7 + $0x1e0] sm:$0xff]
    %v345 = vld [vmem:[#allocation7 + $0x1e8] sm:$0xff]
    %v346 = vld [vmem:[#allocation7 + $0x1f0] sm:$0xff]
    %v347 = vld [vmem:[#allocation7 + $0x1f8] sm:$0xff]
    %v348 = vld [vmem:[#allocation7 + $0x200] sm:$0xff]
    %v349 = vld [vmem:[#allocation7 + $0x208] sm:$0xff]
    %v350 = vld [vmem:[#allocation7 + $0x210] sm:$0xff]
    %v351 = vld [vmem:[#allocation7 + $0x218] sm:$0xff]
    %v352 = vld [vmem:[#allocation7 + $0x220] sm:$0xff]
    %v353 = vld [vmem:[#allocation7 + $0x228] sm:$0xff]
    %v354 = vld [vmem:[#allocation7 + $0x230] sm:$0xff]
    %v355 = vld [vmem:[#allocation7 + $0x238] sm:$0xff]
    %v356 = vld [vmem:[#allocation7 + $0x240] sm:$0xff]
    %v357 = vld [vmem:[#allocation7 + $0x248] sm:$0xff]
    %v358 = vld [vmem:[#allocation7 + $0x250] sm:$0xff]
    %v359 = vld [vmem:[#allocation7 + $0x258] sm:$0xff]
    %v360 = vld [vmem:[#allocation7 + $0x260] sm:$0xff]
    %v361 = vld [vmem:[#allocation7 + $0x268] sm:$0xff]
    %v362 = vld [vmem:[#allocation7 + $0x270] sm:$0xff]
    %v363 = vld [vmem:[#allocation7 + $0x278] sm:$0xff]
    %v364 = vld [vmem:[#allocation7 + $0x280] sm:$0xff]
    %v365 = vld [vmem:[#allocation7 + $0x288] sm:$0xff]
    %v366 = vld [vmem:[#allocation7 + $0x290] sm:$0xff]
    %v367 = vld [vmem:[#allocation7 + $0x298] sm:$0xff]
    %v368 = vld [vmem:[#allocation7 + $0x2a0] sm:$0xff]
    %v369 = vld [vmem:[#allocation7 + $0x2a8] sm:$0xff]
    %v370 = vld [vmem:[#allocation7 + $0x2b0] sm:$0xff]
    %v371 = vld [vmem:[#allocation7 + $0x2b8] sm:$0xff]
    %v372 = vld [vmem:[#allocation7 + $0x2c0] sm:$0xff]
    %v373 = vld [vmem:[#allocation7 + $0x2c8] sm:$0xff]
    %v374 = vld [vmem:[#allocation7 + $0x2d0] sm:$0xff]
    %v375 = vld [vmem:[#allocation7 + $0x2d8] sm:$0xff]
    %v376 = vld [vmem:[#allocation7 + $0x2e0] sm:$0xff]
    %v377 = vld [vmem:[#allocation7 + $0x2e8] sm:$0xff]
    %v378 = vld [vmem:[#allocation7 + $0x2f0] sm:$0xff]
    %v379 = vld [vmem:[#allocation7 + $0x2f8] sm:$0xff]
    %v380 = vld [vmem:[#allocation7 + $0x300] sm:$0xff]
    %v381 = vld [vmem:[#allocation7 + $0x308] sm:$0xff]
    %v382 = vld [vmem:[#allocation7 + $0x310] sm:$0xff]
    %v383 = vld [vmem:[#allocation7 + $0x318] sm:$0xff]
    %v384 = vld [vmem:[#allocation7 + $0x320] sm:$0xff]
    %v385 = vld [vmem:[#allocation7 + $0x328] sm:$0xff]
    %v386 = vld [vmem:[#allocation7 + $0x330] sm:$0xff]
    %v387 = vld [vmem:[#allocation7 + $0x338] sm:$0xff]
    %v388 = vld [vmem:[#allocation7 + $0x340] sm:$0xff]
    %v389 = vld [vmem:[#allocation7 + $0x348] sm:$0xff]
    %v390 = vld [vmem:[#allocation7 + $0x350] sm:$0xff]
    %v391 = vld [vmem:[#allocation7 + $0x358] sm:$0xff]
    %v392 = vld [vmem:[#allocation7 + $0x360] sm:$0xff]
    %v393 = vld [vmem:[#allocation7 + $0x368] sm:$0xff]
    %v394 = vld [vmem:[#allocation7 + $0x370] sm:$0xff]
    %v395 = vld [vmem:[#allocation7 + $0x378] sm:$0xff]
    %v396 = vld [vmem:[#allocation7 + $0x380] sm:$0xff]
    %v397 = vld [vmem:[#allocation7 + $0x388] sm:$0xff]
    %v398 = vld [vmem:[#allocation7 + $0x390] sm:$0xff]
    %v399 = vld [vmem:[#allocation7 + $0x398] sm:$0xff]
    %v400 = vld [vmem:[#allocation7 + $0x3a0] sm:$0xff]
    %v401 = vld [vmem:[#allocation7 + $0x3a8] sm:$0xff]
    %v402 = vld [vmem:[#allocation7 + $0x3b0] sm:$0xff]
    %v403 = vld [vmem:[#allocation7 + $0x3b8] sm:$0xff]
    %v404 = vld [vmem:[#allocation7 + $0x3c0] sm:$0xff]
    %v405 = vld [vmem:[#allocation7 + $0x3c8] sm:$0xff]
    %v406 = vld [vmem:[#allocation7 + $0x3d0] sm:$0xff]
    %v407 = vld [vmem:[#allocation7 + $0x3d8] sm:$0xff]
    %v408 = vld [vmem:[#allocation7 + $0x3e0] sm:$0xff]
    %v409 = vld [vmem:[#allocation7 + $0x3e8] sm:$0xff]
    %v410 = vld [vmem:[#allocation7 + $0x3f0] sm:$0xff]
    %v411 = vld [vmem:[#allocation7 + $0x3f8] sm:$0xff]
    %v412 = vld [vmem:[%s4] sm:$0xf]
    %v414 = vlaneseq
    %v415 = vshrl.u32 %v414, 7
    %v416 = vsub.s32 0, %v415
    %v417 = vrot.slane %v412, %v416
    %v418 = vlaneseq
    %v419 = vshrl.u32 %v418, 7
    %v420 = vsub.s32 1, %v419
    %v421 = vrot.slane %v412, %v420
    %v422 = vlaneseq
    %v423 = vshrl.u32 %v422, 7
    %v424 = vsub.s32 2, %v423
    %v425 = vrot.slane %v412, %v424
    %v426 = vlaneseq
    %v427 = vshrl.u32 %v426, 7
    %v428 = vsub.s32 3, %v427
    %v429 = vrot.slane %v412, %v428
    %v562 = vunpack.c.l.b16 %v284
    %v563 = vunpack.c.h.b16 %v284
    %v564 = vunpack.c.l.b16 %v285
    %v565 = vunpack.c.h.b16 %v285
    %v566 = vunpack.c.l.b16 %v286
    %v567 = vunpack.c.h.b16 %v286
    %v568 = vunpack.c.l.b16 %v287
    %v569 = vunpack.c.h.b16 %v287
    %v570 = vunpack.c.l.b16 %v288
    %v571 = vunpack.c.h.b16 %v288
    %v572 = vunpack.c.l.b16 %v289
    %v573 = vunpack.c.h.b16 %v289
    %v574 = vunpack.c.l.b16 %v290
    %v575 = vunpack.c.h.b16 %v290
    %v576 = vunpack.c.l.b16 %v291
    %v577 = vunpack.c.h.b16 %v291
    %v578 = vunpack.c.l.b16 %v292
    %v579 = vunpack.c.h.b16 %v292
    %v580 = vunpack.c.l.b16 %v293
    %v581 = vunpack.c.h.b16 %v293
    %v582 = vunpack.c.l.b16 %v294
    %v583 = vunpack.c.h.b16 %v294
    %v584 = vunpack.c.l.b16 %v295
    %v585 = vunpack.c.h.b16 %v295
    %v586 = vunpack.c.l.b16 %v296
    %v587 = vunpack.c.h.b16 %v296
    %v588 = vunpack.c.l.b16 %v297
    %v589 = vunpack.c.h.b16 %v297
    %v590 = vunpack.c.l.b16 %v298
    %v591 = vunpack.c.h.b16 %v298
    %v592 = vunpack.c.l.b16 %v299
    %v593 = vunpack.c.h.b16 %v299
    %v594 = vunpack.c.l.b16 %v300
    %v595 = vunpack.c.h.b16 %v300
    %v596 = vunpack.c.l.b16 %v301
    %v597 = vunpack.c.h.b16 %v301
    %v598 = vunpack.c.l.b16 %v302
    %v599 = vunpack.c.h.b16 %v302
    %v600 = vunpack.c.l.b16 %v303
    %v601 = vunpack.c.h.b16 %v303
    %v602 = vunpack.c.l.b16 %v304
    %v603 = vunpack.c.h.b16 %v304
    %v604 = vunpack.c.l.b16 %v305
    %v605 = vunpack.c.h.b16 %v305
    %v606 = vunpack.c.l.b16 %v306
    %v607 = vunpack.c.h.b16 %v306
    %v608 = vunpack.c.l.b16 %v307
    %v609 = vunpack.c.h.b16 %v307
    %v610 = vunpack.c.l.b16 %v308
    %v611 = vunpack.c.h.b16 %v308
    %v612 = vunpack.c.l.b16 %v309
    %v613 = vunpack.c.h.b16 %v309
    %v614 = vunpack.c.l.b16 %v310
    %v615 = vunpack.c.h.b16 %v310
    %v616 = vunpack.c.l.b16 %v311
    %v617 = vunpack.c.h.b16 %v311
    %v618 = vunpack.c.l.b16 %v312
    %v619 = vunpack.c.h.b16 %v312
    %v620 = vunpack.c.l.b16 %v313
    %v621 = vunpack.c.h.b16 %v313
    %v622 = vunpack.c.l.b16 %v314
    %v623 = vunpack.c.h.b16 %v314
    %v624 = vunpack.c.l.b16 %v315
    %v625 = vunpack.c.h.b16 %v315
    %v626 = vunpack.c.l.b16 %v316
    %v627 = vunpack.c.h.b16 %v316
    %v628 = vunpack.c.l.b16 %v317
    %v629 = vunpack.c.h.b16 %v317
    %v630 = vunpack.c.l.b16 %v318
    %v631 = vunpack.c.h.b16 %v318
    %v632 = vunpack.c.l.b16 %v319
    %v633 = vunpack.c.h.b16 %v319
    %v634 = vunpack.c.l.b16 %v320
    %v635 = vunpack.c.h.b16 %v320
    %v636 = vunpack.c.l.b16 %v321
    %v637 = vunpack.c.h.b16 %v321
    %v638 = vunpack.c.l.b16 %v322
    %v639 = vunpack.c.h.b16 %v322
    %v640 = vunpack.c.l.b16 %v323
    %v641 = vunpack.c.h.b16 %v323
    %v642 = vunpack.c.l.b16 %v324
    %v643 = vunpack.c.h.b16 %v324
    %v644 = vunpack.c.l.b16 %v325
    %v645 = vunpack.c.h.b16 %v325
    %v646 = vunpack.c.l.b16 %v326
    %v647 = vunpack.c.h.b16 %v326
    %v648 = vunpack.c.l.b16 %v327
    %v649 = vunpack.c.h.b16 %v327
    %v650 = vunpack.c.l.b16 %v328
    %v651 = vunpack.c.h.b16 %v328
    %v652 = vunpack.c.l.b16 %v329
    %v653 = vunpack.c.h.b16 %v329
    %v654 = vunpack.c.l.b16 %v330
    %v655 = vunpack.c.h.b16 %v330
    %v656 = vunpack.c.l.b16 %v331
    %v657 = vunpack.c.h.b16 %v331
    %v658 = vunpack.c.l.b16 %v332
    %v659 = vunpack.c.h.b16 %v332
    %v660 = vunpack.c.l.b16 %v333
    %v661 = vunpack.c.h.b16 %v333
    %v662 = vunpack.c.l.b16 %v334
    %v663 = vunpack.c.h.b16 %v334
    %v664 = vunpack.c.l.b16 %v335
    %v665 = vunpack.c.h.b16 %v335
    %v666 = vunpack.c.l.b16 %v336
    %v667 = vunpack.c.h.b16 %v336
    %v668 = vunpack.c.l.b16 %v337
    %v669 = vunpack.c.h.b16 %v337
    %v670 = vunpack.c.l.b16 %v338
    %v671 = vunpack.c.h.b16 %v338
    %v672 = vunpack.c.l.b16 %v339
    %v673 = vunpack.c.h.b16 %v339
    %v674 = vunpack.c.l.b16 %v340
    %v675 = vunpack.c.h.b16 %v340
    %v676 = vunpack.c.l.b16 %v341
    %v677 = vunpack.c.h.b16 %v341
    %v678 = vunpack.c.l.b16 %v342
    %v679 = vunpack.c.h.b16 %v342
    %v680 = vunpack.c.l.b16 %v343
    %v681 = vunpack.c.h.b16 %v343
    %v682 = vunpack.c.l.b16 %v344
    %v683 = vunpack.c.h.b16 %v344
    %v684 = vunpack.c.l.b16 %v345
    %v685 = vunpack.c.h.b16 %v345
    %v686 = vunpack.c.l.b16 %v346
    %v687 = vunpack.c.h.b16 %v346
    %v688 = vunpack.c.l.b16 %v347
    %v689 = vunpack.c.h.b16 %v347
    %v690 = vunpack.c.l.b16 %v348
    %v691 = vunpack.c.h.b16 %v348
    %v692 = vunpack.c.l.b16 %v349
    %v693 = vunpack.c.h.b16 %v349
    %v694 = vunpack.c.l.b16 %v350
    %v695 = vunpack.c.h.b16 %v350
    %v696 = vunpack.c.l.b16 %v351
    %v697 = vunpack.c.h.b16 %v351
    %v698 = vunpack.c.l.b16 %v352
    %v699 = vunpack.c.h.b16 %v352
    %v700 = vunpack.c.l.b16 %v353
    %v701 = vunpack.c.h.b16 %v353
    %v702 = vunpack.c.l.b16 %v354
    %v703 = vunpack.c.h.b16 %v354
    %v704 = vunpack.c.l.b16 %v355
    %v705 = vunpack.c.h.b16 %v355
    %v706 = vunpack.c.l.b16 %v356
    %v707 = vunpack.c.h.b16 %v356
    %v708 = vunpack.c.l.b16 %v357
    %v709 = vunpack.c.h.b16 %v357
    %v710 = vunpack.c.l.b16 %v358
    %v711 = vunpack.c.h.b16 %v358
    %v712 = vunpack.c.l.b16 %v359
    %v713 = vunpack.c.h.b16 %v359
    %v714 = vunpack.c.l.b16 %v360
    %v715 = vunpack.c.h.b16 %v360
    %v716 = vunpack.c.l.b16 %v361
    %v717 = vunpack.c.h.b16 %v361
    %v718 = vunpack.c.l.b16 %v362
    %v719 = vunpack.c.h.b16 %v362
    %v720 = vunpack.c.l.b16 %v363
    %v721 = vunpack.c.h.b16 %v363
    %v722 = vunpack.c.l.b16 %v364
    %v723 = vunpack.c.h.b16 %v364
    %v724 = vunpack.c.l.b16 %v365
    %v725 = vunpack.c.h.b16 %v365
    %v726 = vunpack.c.l.b16 %v366
    %v727 = vunpack.c.h.b16 %v366
    %v728 = vunpack.c.l.b16 %v367
    %v729 = vunpack.c.h.b16 %v367
    %v730 = vunpack.c.l.b16 %v368
    %v731 = vunpack.c.h.b16 %v368
    %v732 = vunpack.c.l.b16 %v369
    %v733 = vunpack.c.h.b16 %v369
    %v734 = vunpack.c.l.b16 %v370
    %v735 = vunpack.c.h.b16 %v370
    %v736 = vunpack.c.l.b16 %v371
    %v737 = vunpack.c.h.b16 %v371
    %v738 = vunpack.c.l.b16 %v372
    %v739 = vunpack.c.h.b16 %v372
    %v740 = vunpack.c.l.b16 %v373
    %v741 = vunpack.c.h.b16 %v373
    %v742 = vunpack.c.l.b16 %v374
    %v743 = vunpack.c.h.b16 %v374
    %v744 = vunpack.c.l.b16 %v375
    %v745 = vunpack.c.h.b16 %v375
    %v746 = vunpack.c.l.b16 %v376
    %v747 = vunpack.c.h.b16 %v376
    %v748 = vunpack.c.l.b16 %v377
    %v749 = vunpack.c.h.b16 %v377
    %v750 = vunpack.c.l.b16 %v378
    %v751 = vunpack.c.h.b16 %v378
    %v752 = vunpack.c.l.b16 %v379
    %v753 = vunpack.c.h.b16 %v379
    %v754 = vunpack.c.l.b16 %v380
    %v755 = vunpack.c.h.b16 %v380
    %v756 = vunpack.c.l.b16 %v381
    %v757 = vunpack.c.h.b16 %v381
    %v758 = vunpack.c.l.b16 %v382
    %v759 = vunpack.c.h.b16 %v382
    %v760 = vunpack.c.l.b16 %v383
    %v761 = vunpack.c.h.b16 %v383
    %v762 = vunpack.c.l.b16 %v384
    %v763 = vunpack.c.h.b16 %v384
    %v764 = vunpack.c.l.b16 %v385
    %v765 = vunpack.c.h.b16 %v385
    %v766 = vunpack.c.l.b16 %v386
    %v767 = vunpack.c.h.b16 %v386
    %v768 = vunpack.c.l.b16 %v387
    %v769 = vunpack.c.h.b16 %v387
    %v770 = vunpack.c.l.b16 %v388
    %v771 = vunpack.c.h.b16 %v388
    %v772 = vunpack.c.l.b16 %v389
    %v773 = vunpack.c.h.b16 %v389
    %v774 = vunpack.c.l.b16 %v390
    %v775 = vunpack.c.h.b16 %v390
    %v776 = vunpack.c.l.b16 %v391
    %v777 = vunpack.c.h.b16 %v391
    %v778 = vunpack.c.l.b16 %v392
    %v779 = vunpack.c.h.b16 %v392
    %v780 = vunpack.c.l.b16 %v393
    %v781 = vunpack.c.h.b16 %v393
    %v782 = vunpack.c.l.b16 %v394
    %v783 = vunpack.c.h.b16 %v394
    %v784 = vunpack.c.l.b16 %v395
    %v785 = vunpack.c.h.b16 %v395
    %v786 = vunpack.c.l.b16 %v396
    %v787 = vunpack.c.h.b16 %v396
    %v788 = vunpack.c.l.b16 %v397
    %v789 = vunpack.c.h.b16 %v397
    %v790 = vunpack.c.l.b16 %v398
    %v791 = vunpack.c.h.b16 %v398
    %v792 = vunpack.c.l.b16 %v399
    %v793 = vunpack.c.h.b16 %v399
    %v794 = vunpack.c.l.b16 %v400
    %v795 = vunpack.c.h.b16 %v400
    %v796 = vunpack.c.l.b16 %v401
    %v797 = vunpack.c.h.b16 %v401
    %v798 = vunpack.c.l.b16 %v402
    %v799 = vunpack.c.h.b16 %v402
    %v800 = vunpack.c.l.b16 %v403
    %v801 = vunpack.c.h.b16 %v403
    %v802 = vunpack.c.l.b16 %v404
    %v803 = vunpack.c.h.b16 %v404
    %v804 = vunpack.c.l.b16 %v405
    %v805 = vunpack.c.h.b16 %v405
    %v806 = vunpack.c.l.b16 %v406
    %v807 = vunpack.c.h.b16 %v406
    %v808 = vunpack.c.l.b16 %v407
    %v809 = vunpack.c.h.b16 %v407
    %v810 = vunpack.c.l.b16 %v408
    %v811 = vunpack.c.h.b16 %v408
    %v812 = vunpack.c.l.b16 %v409
    %v813 = vunpack.c.h.b16 %v409
    %v814 = vunpack.c.l.b16 %v410
    %v815 = vunpack.c.h.b16 %v410
    %v816 = vunpack.c.l.b16 %v411
    %v817 = vunpack.c.h.b16 %v411
    %v818 = vpack.c.b16 %v566, %v562
    %v819 = vpack.c.b16 %v567, %v563
    %v820 = vpack.c.b16 %v568, %v564
    %v821 = vpack.c.b16 %v569, %v565
    %v822 = vpack.c.b16 %v574, %v570
    %v823 = vpack.c.b16 %v575, %v571
    %v824 = vpack.c.b16 %v576, %v572
    %v825 = vpack.c.b16 %v577, %v573
    %v826 = vpack.c.b16 %v582, %v578
    %v827 = vpack.c.b16 %v583, %v579
    %v828 = vpack.c.b16 %v584, %v580
    %v829 = vpack.c.b16 %v585, %v581
    %v830 = vpack.c.b16 %v590, %v586
    %v831 = vpack.c.b16 %v591, %v587
    %v832 = vpack.c.b16 %v592, %v588
    %v833 = vpack.c.b16 %v593, %v589
    %v834 = vpack.c.b16 %v598, %v594
    %v835 = vpack.c.b16 %v599, %v595
    %v836 = vpack.c.b16 %v600, %v596
    %v837 = vpack.c.b16 %v601, %v597
    %v838 = vpack.c.b16 %v606, %v602
    %v839 = vpack.c.b16 %v607, %v603
    %v840 = vpack.c.b16 %v608, %v604
    %v841 = vpack.c.b16 %v609, %v605
    %v842 = vpack.c.b16 %v614, %v610
    %v843 = vpack.c.b16 %v615, %v611
    %v844 = vpack.c.b16 %v616, %v612
    %v845 = vpack.c.b16 %v617, %v613
    %v846 = vpack.c.b16 %v622, %v618
    %v847 = vpack.c.b16 %v623, %v619
    %v848 = vpack.c.b16 %v624, %v620
    %v849 = vpack.c.b16 %v625, %v621
    %v850 = vpack.c.b16 %v630, %v626
    %v851 = vpack.c.b16 %v631, %v627
    %v852 = vpack.c.b16 %v632, %v628
    %v853 = vpack.c.b16 %v633, %v629
    %v854 = vpack.c.b16 %v638, %v634
    %v855 = vpack.c.b16 %v639, %v635
    %v856 = vpack.c.b16 %v640, %v636
    %v857 = vpack.c.b16 %v641, %v637
    %v858 = vpack.c.b16 %v646, %v642
    %v859 = vpack.c.b16 %v647, %v643
    %v860 = vpack.c.b16 %v648, %v644
    %v861 = vpack.c.b16 %v649, %v645
    %v862 = vpack.c.b16 %v654, %v650
    %v863 = vpack.c.b16 %v655, %v651
    %v864 = vpack.c.b16 %v656, %v652
    %v865 = vpack.c.b16 %v657, %v653
    %v866 = vpack.c.b16 %v662, %v658
    %v867 = vpack.c.b16 %v663, %v659
    %v868 = vpack.c.b16 %v664, %v660
    %v869 = vpack.c.b16 %v665, %v661
    %v870 = vpack.c.b16 %v670, %v666
    %v871 = vpack.c.b16 %v671, %v667
    %v872 = vpack.c.b16 %v672, %v668
    %v873 = vpack.c.b16 %v673, %v669
    %v874 = vpack.c.b16 %v678, %v674
    %v875 = vpack.c.b16 %v679, %v675
    %v876 = vpack.c.b16 %v680, %v676
    %v877 = vpack.c.b16 %v681, %v677
    %v878 = vpack.c.b16 %v686, %v682
    %v879 = vpack.c.b16 %v687, %v683
    %v880 = vpack.c.b16 %v688, %v684
    %v881 = vpack.c.b16 %v689, %v685
    %v882 = vpack.c.b16 %v694, %v690
    %v883 = vpack.c.b16 %v695, %v691
    %v884 = vpack.c.b16 %v696, %v692
    %v885 = vpack.c.b16 %v697, %v693
    %v886 = vpack.c.b16 %v702, %v698
    %v887 = vpack.c.b16 %v703, %v699
    %v888 = vpack.c.b16 %v704, %v700
    %v889 = vpack.c.b16 %v705, %v701
    %v890 = vpack.c.b16 %v710, %v706
    %v891 = vpack.c.b16 %v711, %v707
    %v892 = vpack.c.b16 %v712, %v708
    %v893 = vpack.c.b16 %v713, %v709
    %v894 = vpack.c.b16 %v718, %v714
    %v895 = vpack.c.b16 %v719, %v715
    %v896 = vpack.c.b16 %v720, %v716
    %v897 = vpack.c.b16 %v721, %v717
    %v898 = vpack.c.b16 %v726, %v722
    %v899 = vpack.c.b16 %v727, %v723
    %v900 = vpack.c.b16 %v728, %v724
    %v901 = vpack.c.b16 %v729, %v725
    %v902 = vpack.c.b16 %v734, %v730
    %v903 = vpack.c.b16 %v735, %v731
    %v904 = vpack.c.b16 %v736, %v732
    %v905 = vpack.c.b16 %v737, %v733
    %v906 = vpack.c.b16 %v742, %v738
    %v907 = vpack.c.b16 %v743, %v739
    %v908 = vpack.c.b16 %v744, %v740
    %v909 = vpack.c.b16 %v745, %v741
    %v910 = vpack.c.b16 %v750, %v746
    %v911 = vpack.c.b16 %v751, %v747
    %v912 = vpack.c.b16 %v752, %v748
    %v913 = vpack.c.b16 %v753, %v749
    %v914 = vpack.c.b16 %v758, %v754
    %v915 = vpack.c.b16 %v759, %v755
    %v916 = vpack.c.b16 %v760, %v756
    %v917 = vpack.c.b16 %v761, %v757
    %v918 = vpack.c.b16 %v766, %v762
    %v919 = vpack.c.b16 %v767, %v763
    %v920 = vpack.c.b16 %v768, %v764
    %v921 = vpack.c.b16 %v769, %v765
    %v922 = vpack.c.b16 %v774, %v770
    %v923 = vpack.c.b16 %v775, %v771
    %v924 = vpack.c.b16 %v776, %v772
    %v925 = vpack.c.b16 %v777, %v773
    %v926 = vpack.c.b16 %v782, %v778
    %v927 = vpack.c.b16 %v783, %v779
    %v928 = vpack.c.b16 %v784, %v780
    %v929 = vpack.c.b16 %v785, %v781
    %v930 = vpack.c.b16 %v790, %v786
    %v931 = vpack.c.b16 %v791, %v787
    %v932 = vpack.c.b16 %v792, %v788
    %v933 = vpack.c.b16 %v793, %v789
    %v934 = vpack.c.b16 %v798, %v794
    %v935 = vpack.c.b16 %v799, %v795
    %v936 = vpack.c.b16 %v800, %v796
    %v937 = vpack.c.b16 %v801, %v797
    %v938 = vpack.c.b16 %v806, %v802
    %v939 = vpack.c.b16 %v807, %v803
    %v940 = vpack.c.b16 %v808, %v804
    %v941 = vpack.c.b16 %v809, %v805
    %v942 = vpack.c.b16 %v814, %v810
    %v943 = vpack.c.b16 %v815, %v811
    %v944 = vpack.c.b16 %v816, %v812
    %v945 = vpack.c.b16 %v817, %v813
    %1074 = vmatprep.subr.bf16.mxu0 %v819
    %1075 = vmatpush1.bf16.msra.mxu0 %v818
    %1076 = vmatprep.subr.bf16.mxu0 %v823
    %1077 = vmatpush1.bf16.msra.mxu0 %v822
    %1078 = vmatprep.subr.bf16.mxu0 %v827
    %1079 = vmatpush1.bf16.msra.mxu0 %v826
    %1080 = vmatprep.subr.bf16.mxu0 %v831
    %1081 = vmatpush1.bf16.msra.mxu0 %v830
    %1082 = vmatprep.subr.bf16.mxu0 %v835
    %1083 = vmatpush1.bf16.msra.mxu0 %v834
    %1084 = vmatprep.subr.bf16.mxu0 %v839
    %1085 = vmatpush1.bf16.msra.mxu0 %v838
    %1086 = vmatprep.subr.bf16.mxu0 %v843
    %1087 = vmatpush1.bf16.msra.mxu0 %v842
    %1088 = vmatprep.subr.bf16.mxu0 %v847
    %1089 = vmatpush1.bf16.msra.mxu0 %v846
    %1090 = vmatprep.subr.bf16.mxu0 %v851
    %1091 = vmatpush1.bf16.msra.mxu0 %v850
    %1092 = vmatprep.subr.bf16.mxu0 %v855
    %1093 = vmatpush1.bf16.msra.mxu0 %v854
    %1094 = vmatprep.subr.bf16.mxu0 %v859
    %1095 = vmatpush1.bf16.msra.mxu0 %v858
    %1096 = vmatprep.subr.bf16.mxu0 %v863
    %1097 = vmatpush1.bf16.msra.mxu0 %v862
    %1098 = vmatprep.subr.bf16.mxu0 %v867
    %1099 = vmatpush1.bf16.msra.mxu0 %v866
    %1100 = vmatprep.subr.bf16.mxu0 %v871
    %1101 = vmatpush1.bf16.msra.mxu0 %v870
    %1102 = vmatprep.subr.bf16.mxu0 %v875
    %1103 = vmatpush1.bf16.msra.mxu0 %v874
    %1104 = vmatprep.subr.bf16.mxu0 %v879
    %1105 = vmatpush1.bf16.msra.mxu0 %v878
    %1106 = vmatprep.mubr.bf16.mxu0 %v281
    %1107 = vmatmul.mubr.bf16.gmra.mrb[0].mxu0 %v280
    %v1108 = vpop.f32.mrb[0].mxu0
    %v1109 = vadd.f32 %v417, %v1108
    %v1110 = vpop.f32.mrb[0].mxu0
    %v1111 = vadd.f32 %v421, %v1110
    %v1112 = vpop.f32.mrb[0].mxu0
    %v1113 = vpop.f32.mrb[0].mxu0
    %1114 = vdwg.mxu0
    %1115 = vmatprep.subr.bf16.mxu0 %v883
    %1116 = vmatpush1.bf16.msra.mxu0 %v882
    %1117 = vmatprep.subr.bf16.mxu0 %v887
    %1118 = vmatpush1.bf16.msra.mxu0 %v886
    %1119 = vmatprep.subr.bf16.mxu0 %v891
    %1120 = vmatpush1.bf16.msra.mxu0 %v890
    %1121 = vmatprep.subr.bf16.mxu0 %v895
    %1122 = vmatpush1.bf16.msra.mxu0 %v894
    %1123 = vmatprep.subr.bf16.mxu0 %v899
    %1124 = vmatpush1.bf16.msra.mxu0 %v898
    %1125 = vmatprep.subr.bf16.mxu0 %v903
    %1126 = vmatpush1.bf16.msra.mxu0 %v902
    %1127 = vmatprep.subr.bf16.mxu0 %v907
    %1128 = vmatpush1.bf16.msra.mxu0 %v906
    %1129 = vmatprep.subr.bf16.mxu0 %v911
    %1130 = vmatpush1.bf16.msra.mxu0 %v910
    %1131 = vmatprep.subr.bf16.mxu0 %v915
    %1132 = vmatpush1.bf16.msra.mxu0 %v914
    %1133 = vmatprep.subr.bf16.mxu0 %v919
    %1134 = vmatpush1.bf16.msra.mxu0 %v918
    %1135 = vmatprep.subr.bf16.mxu0 %v923
    %1136 = vmatpush1.bf16.msra.mxu0 %v922
    %1137 = vmatprep.subr.bf16.mxu0 %v927
    %1138 = vmatpush1.bf16.msra.mxu0 %v926
    %1139 = vmatprep.subr.bf16.mxu0 %v931
    %1140 = vmatpush1.bf16.msra.mxu0 %v930
    %1141 = vmatprep.subr.bf16.mxu0 %v935
    %1142 = vmatpush1.bf16.msra.mxu0 %v934
    %1143 = vmatprep.subr.bf16.mxu0 %v939
    %1144 = vmatpush1.bf16.msra.mxu0 %v938
    %1145 = vmatprep.subr.bf16.mxu0 %v943
    %1146 = vmatpush1.bf16.msra.mxu0 %v942
    %1147 = vmatprep.mubr.bf16.mxu0 %v283
    %1148 = vmatmul.mubr.bf16.gmra.mrb[0].mxu0 %v282
    %v1149 = vpop.f32.mrb[0].mxu0
    %v1150 = vadd.f32 %v1109, %v1149
    %v1151 = vpop.f32.mrb[0].mxu0
    %v1152 = vadd.f32 %v1111, %v1151
    %v1153 = vpop.f32.mrb[0].mxu0
    %v1154 = vpop.f32.mrb[0].mxu0
    %1155 = vdwg.mxu0
    %1156 = vmatprep.subr.bf16.mxu0 %v821
    %1157 = vmatpush1.bf16.msra.mxu0 %v820
    %1158 = vmatprep.subr.bf16.mxu0 %v825
    %1159 = vmatpush1.bf16.msra.mxu0 %v824
    %1160 = vmatprep.subr.bf16.mxu0 %v829
    %1161 = vmatpush1.bf16.msra.mxu0 %v828
    %1162 = vmatprep.subr.bf16.mxu0 %v833
    %1163 = vmatpush1.bf16.msra.mxu0 %v832
    %1164 = vmatprep.subr.bf16.mxu0 %v837
    %1165 = vmatpush1.bf16.msra.mxu0 %v836
    %1166 = vmatprep.subr.bf16.mxu0 %v841
    %1167 = vmatpush1.bf16.msra.mxu0 %v840
    %1168 = vmatprep.subr.bf16.mxu0 %v845
    %1169 = vmatpush1.bf16.msra.mxu0 %v844
    %1170 = vmatprep.subr.bf16.mxu0 %v849
    %1171 = vmatpush1.bf16.msra.mxu0 %v848
    %1172 = vmatprep.subr.bf16.mxu0 %v853
    %1173 = vmatpush1.bf16.msra.mxu0 %v852
    %1174 = vmatprep.subr.bf16.mxu0 %v857
    %1175 = vmatpush1.bf16.msra.mxu0 %v856
    %1176 = vmatprep.subr.bf16.mxu0 %v861
    %1177 = vmatpush1.bf16.msra.mxu0 %v860
    %1178 = vmatprep.subr.bf16.mxu0 %v865
    %1179 = vmatpush1.bf16.msra.mxu0 %v864
    %1180 = vmatprep.subr.bf16.mxu0 %v869
    %1181 = vmatpush1.bf16.msra.mxu0 %v868
    %1182 = vmatprep.subr.bf16.mxu0 %v873
    %1183 = vmatpush1.bf16.msra.mxu0 %v872
    %1184 = vmatprep.subr.bf16.mxu0 %v877
    %1185 = vmatpush1.bf16.msra.mxu0 %v876
    %1186 = vmatprep.subr.bf16.mxu0 %v881
    %1187 = vmatpush1.bf16.msra.mxu0 %v880
    %1188 = vmatprep.mubr.bf16.mxu0 %v281
    %1189 = vmatmul.mubr.bf16.gmra.mrb[0].mxu0 %v280
    %v1190 = vpop.f32.mrb[0].mxu0
    %v1191 = vadd.f32 %v425, %v1190
    %v1192 = vpop.f32.mrb[0].mxu0
    %v1193 = vadd.f32 %v429, %v1192
    %v1194 = vpop.f32.mrb[0].mxu0
    %v1195 = vpop.f32.mrb[0].mxu0
    %1196 = vdwg.mxu0
    %1197 = vmatprep.subr.bf16.mxu0 %v885
    %1198 = vmatpush1.bf16.msra.mxu0 %v884
    %1199 = vmatprep.subr.bf16.mxu0 %v889
    %1200 = vmatpush1.bf16.msra.mxu0 %v888
    %1201 = vmatprep.subr.bf16.mxu0 %v893
    %1202 = vmatpush1.bf16.msra.mxu0 %v892
    %1203 = vmatprep.subr.bf16.mxu0 %v897
    %1204 = vmatpush1.bf16.msra.mxu0 %v896
    %1205 = vmatprep.subr.bf16.mxu0 %v901
    %1206 = vmatpush1.bf16.msra.mxu0 %v900
    %1207 = vmatprep.subr.bf16.mxu0 %v905
    %1208 = vmatpush1.bf16.msra.mxu0 %v904
    %1209 = vmatprep.subr.bf16.mxu0 %v909
    %1210 = vmatpush1.bf16.msra.mxu0 %v908
    %1211 = vmatprep.subr.bf16.mxu0 %v913
    %1212 = vmatpush1.bf16.msra.mxu0 %v912
    %1213 = vmatprep.subr.bf16.mxu0 %v917
    %1214 = vmatpush1.bf16.msra.mxu0 %v916
    %1215 = vmatprep.subr.bf16.mxu0 %v921
    %1216 = vmatpush1.bf16.msra.mxu0 %v920
    %1217 = vmatprep.subr.bf16.mxu0 %v925
    %1218 = vmatpush1.bf16.msra.mxu0 %v924
    %1219 = vmatprep.subr.bf16.mxu0 %v929
    %1220 = vmatpush1.bf16.msra.mxu0 %v928
    %1221 = vmatprep.subr.bf16.mxu0 %v933
    %1222 = vmatpush1.bf16.msra.mxu0 %v932
    %1223 = vmatprep.subr.bf16.mxu0 %v937
    %1224 = vmatpush1.bf16.msra.mxu0 %v936
    %1225 = vmatprep.subr.bf16.mxu0 %v941
    %1226 = vmatpush1.bf16.msra.mxu0 %v940
    %1227 = vmatprep.subr.bf16.mxu0 %v945
    %1228 = vmatpush1.bf16.msra.mxu0 %v944
    %1229 = vmatprep.mubr.bf16.mxu0 %v283
    %1230 = vmatmul.mubr.bf16.gmra.mrb[0].mxu0 %v282
    %v1231 = vpop.f32.mrb[0].mxu0
    %v1232 = vadd.f32 %v1191, %v1231
    %v1233 = vpop.f32.mrb[0].mxu0
    %v1234 = vadd.f32 %v1193, %v1233
    %v1235 = vpop.f32.mrb[0].mxu0
    %v1236 = vpop.f32.mrb[0].mxu0
    %1237 = vdwg.mxu0
    %v1238 = vxor.u32 %v1150, 2147483648
    %v1239 = vxor.u32 %v1152, 2147483648
    %v1240 = vxor.u32 %v1232, 2147483648
    %v1241 = vxor.u32 %v1234, 2147483648
    %v1242 = vmul.f32 %v1238, 1.442695
    %v1243 = vpow.pop %v1242
    %v1244 = vmul.f32 %v1239, 1.442695
    %v1245 = vpow.pop %v1244
    %v1246 = vmul.f32 %v1240, 1.442695
    %v1247 = vpow.pop %v1246
    %v1248 = vmul.f32 %v1241, 1.442695
    %v1249 = vpow.pop %v1248
    %v1250 = vadd.f32 %v1243, 1.0
    %v1251 = vadd.f32 %v1245, 1.0
    %v1252 = vadd.f32 %v1247, 1.0
    %v1253 = vadd.f32 %v1249, 1.0
    %v1254 = vrcp.pop %v1250
    %v1255 = vmul.f32 1.0, %v1254
    %v1256 = vrcp.pop %v1251
    %v1257 = vmul.f32 1.0, %v1256
    %v1258 = vrcp.pop %v1252
    %v1259 = vmul.f32 1.0, %v1258
    %v1260 = vrcp.pop %v1253
    %v1261 = vmul.f32 1.0, %v1260
    %v1262 = vmul.f32 %v1150, %v1255
    %v1263 = vmul.f32 %v1152, %v1257
    %v1264 = vmul.f32 %v1232, %v1259
    %v1265 = vmul.f32 %v1234, %v1261
    %v1266 = vpack.c.bf16 %v1262, %v1262
    %v1267 = vpack.c.bf16 %v1263, %v1263
    %v1268 = vpack.c.bf16 %v1264, %v1264
    %v1269 = vpack.c.bf16 %v1265, %v1265
    %v1270 = vld [vmem:[#allocation8] sm:$0xff]
    %v1271 = vld [vmem:[#allocation8 + $0x8] sm:$0xff]
    %v1272 = vld [vmem:[#allocation8 + $0x10] sm:$0xff]
    %v1273 = vld [vmem:[#allocation8 + $0x18] sm:$0xff]
    %v1274 = vld [vmem:[#allocation8 + $0x20] sm:$0xff]
    %v1275 = vld [vmem:[#allocation8 + $0x28] sm:$0xff]
    %v1276 = vld [vmem:[#allocation8 + $0x30] sm:$0xff]
    %v1277 = vld [vmem:[#allocation8 + $0x38] sm:$0xff]
    %v1278 = vld [vmem:[#allocation8 + $0x40] sm:$0xff]
    %v1279 = vld [vmem:[#allocation8 + $0x48] sm:$0xff]
    %v1280 = vld [vmem:[#allocation8 + $0x50] sm:$0xff]
    %v1281 = vld [vmem:[#allocation8 + $0x58] sm:$0xff]
    %v1282 = vld [vmem:[#allocation8 + $0x60] sm:$0xff]
    %v1283 = vld [vmem:[#allocation8 + $0x68] sm:$0xff]
    %v1284 = vld [vmem:[#allocation8 + $0x70] sm:$0xff]
    %v1285 = vld [vmem:[#allocation8 + $0x78] sm:$0xff]
    %v1286 = vld [vmem:[#allocation8 + $0x80] sm:$0xff]
    %v1287 = vld [vmem:[#allocation8 + $0x88] sm:$0xff]
    %v1288 = vld [vmem:[#allocation8 + $0x90] sm:$0xff]
    %v1289 = vld [vmem:[#allocation8 + $0x98] sm:$0xff]
    %v1290 = vld [vmem:[#allocation8 + $0xa0] sm:$0xff]
    %v1291 = vld [vmem:[#allocation8 + $0xa8] sm:$0xff]
    %v1292 = vld [vmem:[#allocation8 + $0xb0] sm:$0xff]
    %v1293 = vld [vmem:[#allocation8 + $0xb8] sm:$0xff]
    %v1294 = vld [vmem:[#allocation8 + $0xc0] sm:$0xff]
    %v1295 = vld [vmem:[#allocation8 + $0xc8] sm:$0xff]
    %v1296 = vld [vmem:[#allocation8 + $0xd0] sm:$0xff]
    %v1297 = vld [vmem:[#allocation8 + $0xd8] sm:$0xff]
    %v1298 = vld [vmem:[#allocation8 + $0xe0] sm:$0xff]
    %v1299 = vld [vmem:[#allocation8 + $0xe8] sm:$0xff]
    %v1300 = vld [vmem:[#allocation8 + $0xf0] sm:$0xff]
    %v1301 = vld [vmem:[#allocation8 + $0xf8] sm:$0xff]
    %v1302 = vld [vmem:[#allocation8 + $0x100] sm:$0xff]
    %v1303 = vld [vmem:[#allocation8 + $0x108] sm:$0xff]
    %v1304 = vld [vmem:[#allocation8 + $0x110] sm:$0xff]
    %v1305 = vld [vmem:[#allocation8 + $0x118] sm:$0xff]
    %v1306 = vld [vmem:[#allocation8 + $0x120] sm:$0xff]
    %v1307 = vld [vmem:[#allocation8 + $0x128] sm:$0xff]
    %v1308 = vld [vmem:[#allocation8 + $0x130] sm:$0xff]
    %v1309 = vld [vmem:[#allocation8 + $0x138] sm:$0xff]
    %v1310 = vld [vmem:[#allocation8 + $0x140] sm:$0xff]
    %v1311 = vld [vmem:[#allocation8 + $0x148] sm:$0xff]
    %v1312 = vld [vmem:[#allocation8 + $0x150] sm:$0xff]
    %v1313 = vld [vmem:[#allocation8 + $0x158] sm:$0xff]
    %v1314 = vld [vmem:[#allocation8 + $0x160] sm:$0xff]
    %v1315 = vld [vmem:[#allocation8 + $0x168] sm:$0xff]
    %v1316 = vld [vmem:[#allocation8 + $0x170] sm:$0xff]
    %v1317 = vld [vmem:[#allocation8 + $0x178] sm:$0xff]
    %v1318 = vld [vmem:[#allocation8 + $0x180] sm:$0xff]
    %v1319 = vld [vmem:[#allocation8 + $0x188] sm:$0xff]
    %v1320 = vld [vmem:[#allocation8 + $0x190] sm:$0xff]
    %v1321 = vld [vmem:[#allocation8 + $0x198] sm:$0xff]
    %v1322 = vld [vmem:[#allocation8 + $0x1a0] sm:$0xff]
    %v1323 = vld [vmem:[#allocation8 + $0x1a8] sm:$0xff]
    %v1324 = vld [vmem:[#allocation8 + $0x1b0] sm:$0xff]
    %v1325 = vld [vmem:[#allocation8 + $0x1b8] sm:$0xff]
    %v1326 = vld [vmem:[#allocation8 + $0x1c0] sm:$0xff]
    %v1327 = vld [vmem:[#allocation8 + $0x1c8] sm:$0xff]
    %v1328 = vld [vmem:[#allocation8 + $0x1d0] sm:$0xff]
    %v1329 = vld [vmem:[#allocation8 + $0x1d8] sm:$0xff]
    %v1330 = vld [vmem:[#allocation8 + $0x1e0] sm:$0xff]
    %v1331 = vld [vmem:[#allocation8 + $0x1e8] sm:$0xff]
    %v1332 = vld [vmem:[#allocation8 + $0x1f0] sm:$0xff]
    %v1333 = vld [vmem:[#allocation8 + $0x1f8] sm:$0xff]
    %v1334 = vld [vmem:[#allocation8 + $0x200] sm:$0xff]
    %v1335 = vld [vmem:[#allocation8 + $0x208] sm:$0xff]
    %v1336 = vld [vmem:[#allocation8 + $0x210] sm:$0xff]
    %v1337 = vld [vmem:[#allocation8 + $0x218] sm:$0xff]
    %v1338 = vld [vmem:[#allocation8 + $0x220] sm:$0xff]
    %v1339 = vld [vmem:[#allocation8 + $0x228] sm:$0xff]
    %v1340 = vld [vmem:[#allocation8 + $0x230] sm:$0xff]
    %v1341 = vld [vmem:[#allocation8 + $0x238] sm:$0xff]
    %v1342 = vld [vmem:[#allocation8 + $0x240] sm:$0xff]
    %v1343 = vld [vmem:[#allocation8 + $0x248] sm:$0xff]
    %v1344 = vld [vmem:[#allocation8 + $0x250] sm:$0xff]
    %v1345 = vld [vmem:[#allocation8 + $0x258] sm:$0xff]
    %v1346 = vld [vmem:[#allocation8 + $0x260] sm:$0xff]
    %v1347 = vld [vmem:[#allocation8 + $0x268] sm:$0xff]
    %v1348 = vld [vmem:[#allocation8 + $0x270] sm:$0xff]
    %v1349 = vld [vmem:[#allocation8 + $0x278] sm:$0xff]
    %v1350 = vld [vmem:[#allocation8 + $0x280] sm:$0xff]
    %v1351 = vld [vmem:[#allocation8 + $0x288] sm:$0xff]
    %v1352 = vld [vmem:[#allocation8 + $0x290] sm:$0xff]
    %v1353 = vld [vmem:[#allocation8 + $0x298] sm:$0xff]
    %v1354 = vld [vmem:[#allocation8 + $0x2a0] sm:$0xff]
    %v1355 = vld [vmem:[#allocation8 + $0x2a8] sm:$0xff]
    %v1356 = vld [vmem:[#allocation8 + $0x2b0] sm:$0xff]
    %v1357 = vld [vmem:[#allocation8 + $0x2b8] sm:$0xff]
    %v1358 = vld [vmem:[#allocation8 + $0x2c0] sm:$0xff]
    %v1359 = vld [vmem:[#allocation8 + $0x2c8] sm:$0xff]
    %v1360 = vld [vmem:[#allocation8 + $0x2d0] sm:$0xff]
    %v1361 = vld [vmem:[#allocation8 + $0x2d8] sm:$0xff]
    %v1362 = vld [vmem:[#allocation8 + $0x2e0] sm:$0xff]
    %v1363 = vld [vmem:[#allocation8 + $0x2e8] sm:$0xff]
    %v1364 = vld [vmem:[#allocation8 + $0x2f0] sm:$0xff]
    %v1365 = vld [vmem:[#allocation8 + $0x2f8] sm:$0xff]
    %v1366 = vld [vmem:[#allocation8 + $0x300] sm:$0xff]
    %v1367 = vld [vmem:[#allocation8 + $0x308] sm:$0xff]
    %v1368 = vld [vmem:[#allocation8 + $0x310] sm:$0xff]
    %v1369 = vld [vmem:[#allocation8 + $0x318] sm:$0xff]
    %v1370 = vld [vmem:[#allocation8 + $0x320] sm:$0xff]
    %v1371 = vld [vmem:[#allocation8 + $0x328] sm:$0xff]
    %v1372 = vld [vmem:[#allocation8 + $0x330] sm:$0xff]
    %v1373 = vld [vmem:[#allocation8 + $0x338] sm:$0xff]
    %v1374 = vld [vmem:[#allocation8 + $0x340] sm:$0xff]
    %v1375 = vld [vmem:[#allocation8 + $0x348] sm:$0xff]
    %v1376 = vld [vmem:[#allocation8 + $0x350] sm:$0xff]
    %v1377 = vld [vmem:[#allocation8 + $0x358] sm:$0xff]
    %v1378 = vld [vmem:[#allocation8 + $0x360] sm:$0xff]
    %v1379 = vld [vmem:[#allocation8 + $0x368] sm:$0xff]
    %v1380 = vld [vmem:[#allocation8 + $0x370] sm:$0xff]
    %v1381 = vld [vmem:[#allocation8 + $0x378] sm:$0xff]
    %v1382 = vld [vmem:[#allocation8 + $0x380] sm:$0xff]
    %v1383 = vld [vmem:[#allocation8 + $0x388] sm:$0xff]
    %v1384 = vld [vmem:[#allocation8 + $0x390] sm:$0xff]
    %v1385 = vld [vmem:[#allocation8 + $0x398] sm:$0xff]
    %v1386 = vld [vmem:[#allocation8 + $0x3a0] sm:$0xff]
    %v1387 = vld [vmem:[#allocation8 + $0x3a8] sm:$0xff]
    %v1388 = vld [vmem:[#allocation8 + $0x3b0] sm:$0xff]
    %v1389 = vld [vmem:[#allocation8 + $0x3b8] sm:$0xff]
    %v1390 = vld [vmem:[#allocation8 + $0x3c0] sm:$0xff]
    %v1391 = vld [vmem:[#allocation8 + $0x3c8] sm:$0xff]
    %v1392 = vld [vmem:[#allocation8 + $0x3d0] sm:$0xff]
    %v1393 = vld [vmem:[#allocation8 + $0x3d8] sm:$0xff]
    %v1394 = vld [vmem:[#allocation8 + $0x3e0] sm:$0xff]
    %v1395 = vld [vmem:[#allocation8 + $0x3e8] sm:$0xff]
    %v1396 = vld [vmem:[#allocation8 + $0x3f0] sm:$0xff]
    %v1397 = vld [vmem:[#allocation8 + $0x3f8] sm:$0xff]
    %v1398 = vld [vmem:[%s6] sm:$0xf]
    %v1400 = vlaneseq
    %v1401 = vshrl.u32 %v1400, 7
    %v1402 = vsub.s32 0, %v1401
    %v1403 = vrot.slane %v1398, %v1402
    %v1404 = vlaneseq
    %v1405 = vshrl.u32 %v1404, 7
    %v1406 = vsub.s32 1, %v1405
    %v1407 = vrot.slane %v1398, %v1406
    %v1408 = vlaneseq
    %v1409 = vshrl.u32 %v1408, 7
    %v1410 = vsub.s32 2, %v1409
    %v1411 = vrot.slane %v1398, %v1410
    %v1412 = vlaneseq
    %v1413 = vshrl.u32 %v1412, 7
    %v1414 = vsub.s32 3, %v1413
    %v1415 = vrot.slane %v1398, %v1414
    %v1548 = vunpack.c.l.b16 %v1270
    %v1549 = vunpack.c.h.b16 %v1270
    %v1550 = vunpack.c.l.b16 %v1271
    %v1551 = vunpack.c.h.b16 %v1271
    %v1552 = vunpack.c.l.b16 %v1272
    %v1553 = vunpack.c.h.b16 %v1272
    %v1554 = vunpack.c.l.b16 %v1273
    %v1555 = vunpack.c.h.b16 %v1273
    %v1556 = vunpack.c.l.b16 %v1274
    %v1557 = vunpack.c.h.b16 %v1274
    %v1558 = vunpack.c.l.b16 %v1275
    %v1559 = vunpack.c.h.b16 %v1275
    %v1560 = vunpack.c.l.b16 %v1276
    %v1561 = vunpack.c.h.b16 %v1276
    %v1562 = vunpack.c.l.b16 %v1277
    %v1563 = vunpack.c.h.b16 %v1277
    %v1564 = vunpack.c.l.b16 %v1278
    %v1565 = vunpack.c.h.b16 %v1278
    %v1566 = vunpack.c.l.b16 %v1279
    %v1567 = vunpack.c.h.b16 %v1279
    %v1568 = vunpack.c.l.b16 %v1280
    %v1569 = vunpack.c.h.b16 %v1280
    %v1570 = vunpack.c.l.b16 %v1281
    %v1571 = vunpack.c.h.b16 %v1281
    %v1572 = vunpack.c.l.b16 %v1282
    %v1573 = vunpack.c.h.b16 %v1282
    %v1574 = vunpack.c.l.b16 %v1283
    %v1575 = vunpack.c.h.b16 %v1283
    %v1576 = vunpack.c.l.b16 %v1284
    %v1577 = vunpack.c.h.b16 %v1284
    %v1578 = vunpack.c.l.b16 %v1285
    %v1579 = vunpack.c.h.b16 %v1285
    %v1580 = vunpack.c.l.b16 %v1286
    %v1581 = vunpack.c.h.b16 %v1286
    %v1582 = vunpack.c.l.b16 %v1287
    %v1583 = vunpack.c.h.b16 %v1287
    %v1584 = vunpack.c.l.b16 %v1288
    %v1585 = vunpack.c.h.b16 %v1288
    %v1586 = vunpack.c.l.b16 %v1289
    %v1587 = vunpack.c.h.b16 %v1289
    %v1588 = vunpack.c.l.b16 %v1290
    %v1589 = vunpack.c.h.b16 %v1290
    %v1590 = vunpack.c.l.b16 %v1291
    %v1591 = vunpack.c.h.b16 %v1291
    %v1592 = vunpack.c.l.b16 %v1292
    %v1593 = vunpack.c.h.b16 %v1292
    %v1594 = vunpack.c.l.b16 %v1293
    %v1595 = vunpack.c.h.b16 %v1293
    %v1596 = vunpack.c.l.b16 %v1294
    %v1597 = vunpack.c.h.b16 %v1294
    %v1598 = vunpack.c.l.b16 %v1295
    %v1599 = vunpack.c.h.b16 %v1295
    %v1600 = vunpack.c.l.b16 %v1296
    %v1601 = vunpack.c.h.b16 %v1296
    %v1602 = vunpack.c.l.b16 %v1297
    %v1603 = vunpack.c.h.b16 %v1297
    %v1604 = vunpack.c.l.b16 %v1298
    %v1605 = vunpack.c.h.b16 %v1298
    %v1606 = vunpack.c.l.b16 %v1299
    %v1607 = vunpack.c.h.b16 %v1299
    %v1608 = vunpack.c.l.b16 %v1300
    %v1609 = vunpack.c.h.b16 %v1300
    %v1610 = vunpack.c.l.b16 %v1301
    %v1611 = vunpack.c.h.b16 %v1301
    %v1612 = vunpack.c.l.b16 %v1302
    %v1613 = vunpack.c.h.b16 %v1302
    %v1614 = vunpack.c.l.b16 %v1303
    %v1615 = vunpack.c.h.b16 %v1303
    %v1616 = vunpack.c.l.b16 %v1304
    %v1617 = vunpack.c.h.b16 %v1304
    %v1618 = vunpack.c.l.b16 %v1305
    %v1619 = vunpack.c.h.b16 %v1305
    %v1620 = vunpack.c.l.b16 %v1306
    %v1621 = vunpack.c.h.b16 %v1306
    %v1622 = vunpack.c.l.b16 %v1307
    %v1623 = vunpack.c.h.b16 %v1307
    %v1624 = vunpack.c.l.b16 %v1308
    %v1625 = vunpack.c.h.b16 %v1308
    %v1626 = vunpack.c.l.b16 %v1309
    %v1627 = vunpack.c.h.b16 %v1309
    %v1628 = vunpack.c.l.b16 %v1310
    %v1629 = vunpack.c.h.b16 %v1310
    %v1630 = vunpack.c.l.b16 %v1311
    %v1631 = vunpack.c.h.b16 %v1311
    %v1632 = vunpack.c.l.b16 %v1312
    %v1633 = vunpack.c.h.b16 %v1312
    %v1634 = vunpack.c.l.b16 %v1313
    %v1635 = vunpack.c.h.b16 %v1313
    %v1636 = vunpack.c.l.b16 %v1314
    %v1637 = vunpack.c.h.b16 %v1314
    %v1638 = vunpack.c.l.b16 %v1315
    %v1639 = vunpack.c.h.b16 %v1315
    %v1640 = vunpack.c.l.b16 %v1316
    %v1641 = vunpack.c.h.b16 %v1316
    %v1642 = vunpack.c.l.b16 %v1317
    %v1643 = vunpack.c.h.b16 %v1317
    %v1644 = vunpack.c.l.b16 %v1318
    %v1645 = vunpack.c.h.b16 %v1318
    %v1646 = vunpack.c.l.b16 %v1319
    %v1647 = vunpack.c.h.b16 %v1319
    %v1648 = vunpack.c.l.b16 %v1320
    %v1649 = vunpack.c.h.b16 %v1320
    %v1650 = vunpack.c.l.b16 %v1321
    %v1651 = vunpack.c.h.b16 %v1321
    %v1652 = vunpack.c.l.b16 %v1322
    %v1653 = vunpack.c.h.b16 %v1322
    %v1654 = vunpack.c.l.b16 %v1323
    %v1655 = vunpack.c.h.b16 %v1323
    %v1656 = vunpack.c.l.b16 %v1324
    %v1657 = vunpack.c.h.b16 %v1324
    %v1658 = vunpack.c.l.b16 %v1325
    %v1659 = vunpack.c.h.b16 %v1325
    %v1660 = vunpack.c.l.b16 %v1326
    %v1661 = vunpack.c.h.b16 %v1326
    %v1662 = vunpack.c.l.b16 %v1327
    %v1663 = vunpack.c.h.b16 %v1327
    %v1664 = vunpack.c.l.b16 %v1328
    %v1665 = vunpack.c.h.b16 %v1328
    %v1666 = vunpack.c.l.b16 %v1329
    %v1667 = vunpack.c.h.b16 %v1329
    %v1668 = vunpack.c.l.b16 %v1330
    %v1669 = vunpack.c.h.b16 %v1330
    %v1670 = vunpack.c.l.b16 %v1331
    %v1671 = vunpack.c.h.b16 %v1331
    %v1672 = vunpack.c.l.b16 %v1332
    %v1673 = vunpack.c.h.b16 %v1332
    %v1674 = vunpack.c.l.b16 %v1333
    %v1675 = vunpack.c.h.b16 %v1333
    %v1676 = vunpack.c.l.b16 %v1334
    %v1677 = vunpack.c.h.b16 %v1334
    %v1678 = vunpack.c.l.b16 %v1335
    %v1679 = vunpack.c.h.b16 %v1335
    %v1680 = vunpack.c.l.b16 %v1336
    %v1681 = vunpack.c.h.b16 %v1336
    %v1682 = vunpack.c.l.b16 %v1337
    %v1683 = vunpack.c.h.b16 %v1337
    %v1684 = vunpack.c.l.b16 %v1338
    %v1685 = vunpack.c.h.b16 %v1338
    %v1686 = vunpack.c.l.b16 %v1339
    %v1687 = vunpack.c.h.b16 %v1339
    %v1688 = vunpack.c.l.b16 %v1340
    %v1689 = vunpack.c.h.b16 %v1340
    %v1690 = vunpack.c.l.b16 %v1341
    %v1691 = vunpack.c.h.b16 %v1341
    %v1692 = vunpack.c.l.b16 %v1342
    %v1693 = vunpack.c.h.b16 %v1342
    %v1694 = vunpack.c.l.b16 %v1343
    %v1695 = vunpack.c.h.b16 %v1343
    %v1696 = vunpack.c.l.b16 %v1344
    %v1697 = vunpack.c.h.b16 %v1344
    %v1698 = vunpack.c.l.b16 %v1345
    %v1699 = vunpack.c.h.b16 %v1345
    %v1700 = vunpack.c.l.b16 %v1346
    %v1701 = vunpack.c.h.b16 %v1346
    %v1702 = vunpack.c.l.b16 %v1347
    %v1703 = vunpack.c.h.b16 %v1347
    %v1704 = vunpack.c.l.b16 %v1348
    %v1705 = vunpack.c.h.b16 %v1348
    %v1706 = vunpack.c.l.b16 %v1349
    %v1707 = vunpack.c.h.b16 %v1349
    %v1708 = vunpack.c.l.b16 %v1350
    %v1709 = vunpack.c.h.b16 %v1350
    %v1710 = vunpack.c.l.b16 %v1351
    %v1711 = vunpack.c.h.b16 %v1351
    %v1712 = vunpack.c.l.b16 %v1352
    %v1713 = vunpack.c.h.b16 %v1352
    %v1714 = vunpack.c.l.b16 %v1353
    %v1715 = vunpack.c.h.b16 %v1353
    %v1716 = vunpack.c.l.b16 %v1354
    %v1717 = vunpack.c.h.b16 %v1354
    %v1718 = vunpack.c.l.b16 %v1355
    %v1719 = vunpack.c.h.b16 %v1355
    %v1720 = vunpack.c.l.b16 %v1356
    %v1721 = vunpack.c.h.b16 %v1356
    %v1722 = vunpack.c.l.b16 %v1357
    %v1723 = vunpack.c.h.b16 %v1357
    %v1724 = vunpack.c.l.b16 %v1358
    %v1725 = vunpack.c.h.b16 %v1358
    %v1726 = vunpack.c.l.b16 %v1359
    %v1727 = vunpack.c.h.b16 %v1359
    %v1728 = vunpack.c.l.b16 %v1360
    %v1729 = vunpack.c.h.b16 %v1360
    %v1730 = vunpack.c.l.b16 %v1361
    %v1731 = vunpack.c.h.b16 %v1361
    %v1732 = vunpack.c.l.b16 %v1362
    %v1733 = vunpack.c.h.b16 %v1362
    %v1734 = vunpack.c.l.b16 %v1363
    %v1735 = vunpack.c.h.b16 %v1363
    %v1736 = vunpack.c.l.b16 %v1364
    %v1737 = vunpack.c.h.b16 %v1364
    %v1738 = vunpack.c.l.b16 %v1365
    %v1739 = vunpack.c.h.b16 %v1365
    %v1740 = vunpack.c.l.b16 %v1366
    %v1741 = vunpack.c.h.b16 %v1366
    %v1742 = vunpack.c.l.b16 %v1367
    %v1743 = vunpack.c.h.b16 %v1367
    %v1744 = vunpack.c.l.b16 %v1368
    %v1745 = vunpack.c.h.b16 %v1368
    %v1746 = vunpack.c.l.b16 %v1369
    %v1747 = vunpack.c.h.b16 %v1369
    %v1748 = vunpack.c.l.b16 %v1370
    %v1749 = vunpack.c.h.b16 %v1370
    %v1750 = vunpack.c.l.b16 %v1371
    %v1751 = vunpack.c.h.b16 %v1371
    %v1752 = vunpack.c.l.b16 %v1372
    %v1753 = vunpack.c.h.b16 %v1372
    %v1754 = vunpack.c.l.b16 %v1373
    %v1755 = vunpack.c.h.b16 %v1373
    %v1756 = vunpack.c.l.b16 %v1374
    %v1757 = vunpack.c.h.b16 %v1374
    %v1758 = vunpack.c.l.b16 %v1375
    %v1759 = vunpack.c.h.b16 %v1375
    %v1760 = vunpack.c.l.b16 %v1376
    %v1761 = vunpack.c.h.b16 %v1376
    %v1762 = vunpack.c.l.b16 %v1377
    %v1763 = vunpack.c.h.b16 %v1377
    %v1764 = vunpack.c.l.b16 %v1378
    %v1765 = vunpack.c.h.b16 %v1378
    %v1766 = vunpack.c.l.b16 %v1379
    %v1767 = vunpack.c.h.b16 %v1379
    %v1768 = vunpack.c.l.b16 %v1380
    %v1769 = vunpack.c.h.b16 %v1380
    %v1770 = vunpack.c.l.b16 %v1381
    %v1771 = vunpack.c.h.b16 %v1381
    %v1772 = vunpack.c.l.b16 %v1382
    %v1773 = vunpack.c.h.b16 %v1382
    %v1774 = vunpack.c.l.b16 %v1383
    %v1775 = vunpack.c.h.b16 %v1383
    %v1776 = vunpack.c.l.b16 %v1384
    %v1777 = vunpack.c.h.b16 %v1384
    %v1778 = vunpack.c.l.b16 %v1385
    %v1779 = vunpack.c.h.b16 %v1385
    %v1780 = vunpack.c.l.b16 %v1386
    %v1781 = vunpack.c.h.b16 %v1386
    %v1782 = vunpack.c.l.b16 %v1387
    %v1783 = vunpack.c.h.b16 %v1387
    %v1784 = vunpack.c.l.b16 %v1388
    %v1785 = vunpack.c.h.b16 %v1388
    %v1786 = vunpack.c.l.b16 %v1389
    %v1787 = vunpack.c.h.b16 %v1389
    %v1788 = vunpack.c.l.b16 %v1390
    %v1789 = vunpack.c.h.b16 %v1390
    %v1790 = vunpack.c.l.b16 %v1391
    %v1791 = vunpack.c.h.b16 %v1391
    %v1792 = vunpack.c.l.b16 %v1392
    %v1793 = vunpack.c.h.b16 %v1392
    %v1794 = vunpack.c.l.b16 %v1393
    %v1795 = vunpack.c.h.b16 %v1393
    %v1796 = vunpack.c.l.b16 %v1394
    %v1797 = vunpack.c.h.b16 %v1394
    %v1798 = vunpack.c.l.b16 %v1395
    %v1799 = vunpack.c.h.b16 %v1395
    %v1800 = vunpack.c.l.b16 %v1396
    %v1801 = vunpack.c.h.b16 %v1396
    %v1802 = vunpack.c.l.b16 %v1397
    %v1803 = vunpack.c.h.b16 %v1397
    %v1804 = vpack.c.b16 %v1552, %v1548
    %v1805 = vpack.c.b16 %v1553, %v1549
    %v1806 = vpack.c.b16 %v1554, %v1550
    %v1807 = vpack.c.b16 %v1555, %v1551
    %v1808 = vpack.c.b16 %v1560, %v1556
    %v1809 = vpack.c.b16 %v1561, %v1557
    %v1810 = vpack.c.b16 %v1562, %v1558
    %v1811 = vpack.c.b16 %v1563, %v1559
    %v1812 = vpack.c.b16 %v1568, %v1564
    %v1813 = vpack.c.b16 %v1569, %v1565
    %v1814 = vpack.c.b16 %v1570, %v1566
    %v1815 = vpack.c.b16 %v1571, %v1567
    %v1816 = vpack.c.b16 %v1576, %v1572
    %v1817 = vpack.c.b16 %v1577, %v1573
    %v1818 = vpack.c.b16 %v1578, %v1574
    %v1819 = vpack.c.b16 %v1579, %v1575
    %v1820 = vpack.c.b16 %v1584, %v1580
    %v1821 = vpack.c.b16 %v1585, %v1581
    %v1822 = vpack.c.b16 %v1586, %v1582
    %v1823 = vpack.c.b16 %v1587, %v1583
    %v1824 = vpack.c.b16 %v1592, %v1588
    %v1825 = vpack.c.b16 %v1593, %v1589
    %v1826 = vpack.c.b16 %v1594, %v1590
    %v1827 = vpack.c.b16 %v1595, %v1591
    %v1828 = vpack.c.b16 %v1600, %v1596
    %v1829 = vpack.c.b16 %v1601, %v1597
    %v1830 = vpack.c.b16 %v1602, %v1598
    %v1831 = vpack.c.b16 %v1603, %v1599
    %v1832 = vpack.c.b16 %v1608, %v1604
    %v1833 = vpack.c.b16 %v1609, %v1605
    %v1834 = vpack.c.b16 %v1610, %v1606
    %v1835 = vpack.c.b16 %v1611, %v1607
    %v1836 = vpack.c.b16 %v1616, %v1612
    %v1837 = vpack.c.b16 %v1617, %v1613
    %v1838 = vpack.c.b16 %v1618, %v1614
    %v1839 = vpack.c.b16 %v1619, %v1615
    %v1840 = vpack.c.b16 %v1624, %v1620
    %v1841 = vpack.c.b16 %v1625, %v1621
    %v1842 = vpack.c.b16 %v1626, %v1622
    %v1843 = vpack.c.b16 %v1627, %v1623
    %v1844 = vpack.c.b16 %v1632, %v1628
    %v1845 = vpack.c.b16 %v1633, %v1629
    %v1846 = vpack.c.b16 %v1634, %v1630
    %v1847 = vpack.c.b16 %v1635, %v1631
    %v1848 = vpack.c.b16 %v1640, %v1636
    %v1849 = vpack.c.b16 %v1641, %v1637
    %v1850 = vpack.c.b16 %v1642, %v1638
    %v1851 = vpack.c.b16 %v1643, %v1639
    %v1852 = vpack.c.b16 %v1648, %v1644
    %v1853 = vpack.c.b16 %v1649, %v1645
    %v1854 = vpack.c.b16 %v1650, %v1646
    %v1855 = vpack.c.b16 %v1651, %v1647
    %v1856 = vpack.c.b16 %v1656, %v1652
    %v1857 = vpack.c.b16 %v1657, %v1653
    %v1858 = vpack.c.b16 %v1658, %v1654
    %v1859 = vpack.c.b16 %v1659, %v1655
    %v1860 = vpack.c.b16 %v1664, %v1660
    %v1861 = vpack.c.b16 %v1665, %v1661
    %v1862 = vpack.c.b16 %v1666, %v1662
    %v1863 = vpack.c.b16 %v1667, %v1663
    %v1864 = vpack.c.b16 %v1672, %v1668
    %v1865 = vpack.c.b16 %v1673, %v1669
    %v1866 = vpack.c.b16 %v1674, %v1670
    %v1867 = vpack.c.b16 %v1675, %v1671
    %v1868 = vpack.c.b16 %v1680, %v1676
    %v1869 = vpack.c.b16 %v1681, %v1677
    %v1870 = vpack.c.b16 %v1682, %v1678
    %v1871 = vpack.c.b16 %v1683, %v1679
    %v1872 = vpack.c.b16 %v1688, %v1684
    %v1873 = vpack.c.b16 %v1689, %v1685
    %v1874 = vpack.c.b16 %v1690, %v1686
    %v1875 = vpack.c.b16 %v1691, %v1687
    %v1876 = vpack.c.b16 %v1696, %v1692
    %v1877 = vpack.c.b16 %v1697, %v1693
    %v1878 = vpack.c.b16 %v1698, %v1694
    %v1879 = vpack.c.b16 %v1699, %v1695
    %v1880 = vpack.c.b16 %v1704, %v1700
    %v1881 = vpack.c.b16 %v1705, %v1701
    %v1882 = vpack.c.b16 %v1706, %v1702
    %v1883 = vpack.c.b16 %v1707, %v1703
    %v1884 = vpack.c.b16 %v1712, %v1708
    %v1885 = vpack.c.b16 %v1713, %v1709
    %v1886 = vpack.c.b16 %v1714, %v1710
    %v1887 = vpack.c.b16 %v1715, %v1711
    %v1888 = vpack.c.b16 %v1720, %v1716
    %v1889 = vpack.c.b16 %v1721, %v1717
    %v1890 = vpack.c.b16 %v1722, %v1718
    %v1891 = vpack.c.b16 %v1723, %v1719
    %v1892 = vpack.c.b16 %v1728, %v1724
    %v1893 = vpack.c.b16 %v1729, %v1725
    %v1894 = vpack.c.b16 %v1730, %v1726
    %v1895 = vpack.c.b16 %v1731, %v1727
    %v1896 = vpack.c.b16 %v1736, %v1732
    %v1897 = vpack.c.b16 %v1737, %v1733
    %v1898 = vpack.c.b16 %v1738, %v1734
    %v1899 = vpack.c.b16 %v1739, %v1735
    %v1900 = vpack.c.b16 %v1744, %v1740
    %v1901 = vpack.c.b16 %v1745, %v1741
    %v1902 = vpack.c.b16 %v1746, %v1742
    %v1903 = vpack.c.b16 %v1747, %v1743
    %v1904 = vpack.c.b16 %v1752, %v1748
    %v1905 = vpack.c.b16 %v1753, %v1749
    %v1906 = vpack.c.b16 %v1754, %v1750
    %v1907 = vpack.c.b16 %v1755, %v1751
    %v1908 = vpack.c.b16 %v1760, %v1756
    %v1909 = vpack.c.b16 %v1761, %v1757
    %v1910 = vpack.c.b16 %v1762, %v1758
    %v1911 = vpack.c.b16 %v1763, %v1759
    %v1912 = vpack.c.b16 %v1768, %v1764
    %v1913 = vpack.c.b16 %v1769, %v1765
    %v1914 = vpack.c.b16 %v1770, %v1766
    %v1915 = vpack.c.b16 %v1771, %v1767
    %v1916 = vpack.c.b16 %v1776, %v1772
    %v1917 = vpack.c.b16 %v1777, %v1773
    %v1918 = vpack.c.b16 %v1778, %v1774
    %v1919 = vpack.c.b16 %v1779, %v1775
    %v1920 = vpack.c.b16 %v1784, %v1780
    %v1921 = vpack.c.b16 %v1785, %v1781
    %v1922 = vpack.c.b16 %v1786, %v1782
    %v1923 = vpack.c.b16 %v1787, %v1783
    %v1924 = vpack.c.b16 %v1792, %v1788
    %v1925 = vpack.c.b16 %v1793, %v1789
    %v1926 = vpack.c.b16 %v1794, %v1790
    %v1927 = vpack.c.b16 %v1795, %v1791
    %v1928 = vpack.c.b16 %v1800, %v1796
    %v1929 = vpack.c.b16 %v1801, %v1797
    %v1930 = vpack.c.b16 %v1802, %v1798
    %v1931 = vpack.c.b16 %v1803, %v1799
    %2060 = vmatprep.subr.bf16.mxu0 %v1805
    %2061 = vmatpush1.bf16.msra.mxu0 %v1804
    %2062 = vmatprep.subr.bf16.mxu0 %v1809
    %2063 = vmatpush1.bf16.msra.mxu0 %v1808
    %2064 = vmatprep.subr.bf16.mxu0 %v1813
    %2065 = vmatpush1.bf16.msra.mxu0 %v1812
    %2066 = vmatprep.subr.bf16.mxu0 %v1817
    %2067 = vmatpush1.bf16.msra.mxu0 %v1816
    %2068 = vmatprep.subr.bf16.mxu0 %v1821
    %2069 = vmatpush1.bf16.msra.mxu0 %v1820
    %2070 = vmatprep.subr.bf16.mxu0 %v1825
    %2071 = vmatpush1.bf16.msra.mxu0 %v1824
    %2072 = vmatprep.subr.bf16.mxu0 %v1829
    %2073 = vmatpush1.bf16.msra.mxu0 %v1828
    %2074 = vmatprep.subr.bf16.mxu0 %v1833
    %2075 = vmatpush1.bf16.msra.mxu0 %v1832
    %2076 = vmatprep.subr.bf16.mxu0 %v1837
    %2077 = vmatpush1.bf16.msra.mxu0 %v1836
    %2078 = vmatprep.subr.bf16.mxu0 %v1841
    %2079 = vmatpush1.bf16.msra.mxu0 %v1840
    %2080 = vmatprep.subr.bf16.mxu0 %v1845
    %2081 = vmatpush1.bf16.msra.mxu0 %v1844
    %2082 = vmatprep.subr.bf16.mxu0 %v1849
    %2083 = vmatpush1.bf16.msra.mxu0 %v1848
    %2084 = vmatprep.subr.bf16.mxu0 %v1853
    %2085 = vmatpush1.bf16.msra.mxu0 %v1852
    %2086 = vmatprep.subr.bf16.mxu0 %v1857
    %2087 = vmatpush1.bf16.msra.mxu0 %v1856
    %2088 = vmatprep.subr.bf16.mxu0 %v1861
    %2089 = vmatpush1.bf16.msra.mxu0 %v1860
    %2090 = vmatprep.subr.bf16.mxu0 %v1865
    %2091 = vmatpush1.bf16.msra.mxu0 %v1864
    %2092 = vmatprep.mubr.bf16.mxu0 %v1267
    %2093 = vmatmul.mubr.bf16.gmra.mrb[0].mxu0 %v1266
    %v2094 = vpop.f32.mrb[0].mxu0
    %v2095 = vadd.f32 %v1403, %v2094
    %v2096 = vpop.f32.mrb[0].mxu0
    %v2097 = vadd.f32 %v1407, %v2096
    %v2098 = vpop.f32.mrb[0].mxu0
    %v2099 = vpop.f32.mrb[0].mxu0
    %2100 = vdwg.mxu0
    %2101 = vmatprep.subr.bf16.mxu0 %v1869
    %2102 = vmatpush1.bf16.msra.mxu0 %v1868
    %2103 = vmatprep.subr.bf16.mxu0 %v1873
    %2104 = vmatpush1.bf16.msra.mxu0 %v1872
    %2105 = vmatprep.subr.bf16.mxu0 %v1877
    %2106 = vmatpush1.bf16.msra.mxu0 %v1876
    %2107 = vmatprep.subr.bf16.mxu0 %v1881
    %2108 = vmatpush1.bf16.msra.mxu0 %v1880
    %2109 = vmatprep.subr.bf16.mxu0 %v1885
    %2110 = vmatpush1.bf16.msra.mxu0 %v1884
    %2111 = vmatprep.subr.bf16.mxu0 %v1889
    %2112 = vmatpush1.bf16.msra.mxu0 %v1888
    %2113 = vmatprep.subr.bf16.mxu0 %v1893
    %2114 = vmatpush1.bf16.msra.mxu0 %v1892
    %2115 = vmatprep.subr.bf16.mxu0 %v1897
    %2116 = vmatpush1.bf16.msra.mxu0 %v1896
    %2117 = vmatprep.subr.bf16.mxu0 %v1901
    %2118 = vmatpush1.bf16.msra.mxu0 %v1900
    %2119 = vmatprep.subr.bf16.mxu0 %v1905
    %2120 = vmatpush1.bf16.msra.mxu0 %v1904
    %2121 = vmatprep.subr.bf16.mxu0 %v1909
    %2122 = vmatpush1.bf16.msra.mxu0 %v1908
    %2123 = vmatprep.subr.bf16.mxu0 %v1913
    %2124 = vmatpush1.bf16.msra.mxu0 %v1912
    %2125 = vmatprep.subr.bf16.mxu0 %v1917
    %2126 = vmatpush1.bf16.msra.mxu0 %v1916
    %2127 = vmatprep.subr.bf16.mxu0 %v1921
    %2128 = vmatpush1.bf16.msra.mxu0 %v1920
    %2129 = vmatprep.subr.bf16.mxu0 %v1925
    %2130 = vmatpush1.bf16.msra.mxu0 %v1924
    %2131 = vmatprep.subr.bf16.mxu0 %v1929
    %2132 = vmatpush1.bf16.msra.mxu0 %v1928
    %2133 = vmatprep.mubr.bf16.mxu0 %v1269
    %2134 = vmatmul.mubr.bf16.gmra.mrb[0].mxu0 %v1268
    %v2135 = vpop.f32.mrb[0].mxu0
    %v2136 = vadd.f32 %v2095, %v2135
    %v2137 = vpop.f32.mrb[0].mxu0
    %v2138 = vadd.f32 %v2097, %v2137
    %v2139 = vpop.f32.mrb[0].mxu0
    %v2140 = vpop.f32.mrb[0].mxu0
    %2141 = vdwg.mxu0
    %2142 = vmatprep.subr.bf16.mxu0 %v1807
    %2143 = vmatpush1.bf16.msra.mxu0 %v1806
    %2144 = vmatprep.subr.bf16.mxu0 %v1811
    %2145 = vmatpush1.bf16.msra.mxu0 %v1810
    %2146 = vmatprep.subr.bf16.mxu0 %v1815
    %2147 = vmatpush1.bf16.msra.mxu0 %v1814
    %2148 = vmatprep.subr.bf16.mxu0 %v1819
    %2149 = vmatpush1.bf16.msra.mxu0 %v1818
    %2150 = vmatprep.subr.bf16.mxu0 %v1823
    %2151 = vmatpush1.bf16.msra.mxu0 %v1822
    %2152 = vmatprep.subr.bf16.mxu0 %v1827
    %2153 = vmatpush1.bf16.msra.mxu0 %v1826
    %2154 = vmatprep.subr.bf16.mxu0 %v1831
    %2155 = vmatpush1.bf16.msra.mxu0 %v1830
    %2156 = vmatprep.subr.bf16.mxu0 %v1835
    %2157 = vmatpush1.bf16.msra.mxu0 %v1834
    %2158 = vmatprep.subr.bf16.mxu0 %v1839
    %2159 = vmatpush1.bf16.msra.mxu0 %v1838
    %2160 = vmatprep.subr.bf16.mxu0 %v1843
    %2161 = vmatpush1.bf16.msra.mxu0 %v1842
    %2162 = vmatprep.subr.bf16.mxu0 %v1847
    %2163 = vmatpush1.bf16.msra.mxu0 %v1846
    %2164 = vmatprep.subr.bf16.mxu0 %v1851
    %2165 = vmatpush1.bf16.msra.mxu0 %v1850
    %2166 = vmatprep.subr.bf16.mxu0 %v1855
    %2167 = vmatpush1.bf16.msra.mxu0 %v1854
    %2168 = vmatprep.subr.bf16.mxu0 %v1859
    %2169 = vmatpush1.bf16.msra.mxu0 %v1858
    %2170 = vmatprep.subr.bf16.mxu0 %v1863
    %2171 = vmatpush1.bf16.msra.mxu0 %v1862
    %2172 = vmatprep.subr.bf16.mxu0 %v1867
    %2173 = vmatpush1.bf16.msra.mxu0 %v1866
    %2174 = vmatprep.mubr.bf16.mxu0 %v1267
    %2175 = vmatmul.mubr.bf16.gmra.mrb[0].mxu0 %v1266
    %v2176 = vpop.f32.mrb[0].mxu0
    %v2177 = vadd.f32 %v1411, %v2176
    %v2178 = vpop.f32.mrb[0].mxu0
    %v2179 = vadd.f32 %v1415, %v2178
    %v2180 = vpop.f32.mrb[0].mxu0
    %v2181 = vpop.f32.mrb[0].mxu0
    %2182 = vdwg.mxu0
    %2183 = vmatprep.subr.bf16.mxu0 %v1871
    %2184 = vmatpush1.bf16.msra.mxu0 %v1870
    %2185 = vmatprep.subr.bf16.mxu0 %v1875
    %2186 = vmatpush1.bf16.msra.mxu0 %v1874
    %2187 = vmatprep.subr.bf16.mxu0 %v1879
    %2188 = vmatpush1.bf16.msra.mxu0 %v1878
    %2189 = vmatprep.subr.bf16.mxu0 %v1883
    %2190 = vmatpush1.bf16.msra.mxu0 %v1882
    %2191 = vmatprep.subr.bf16.mxu0 %v1887
    %2192 = vmatpush1.bf16.msra.mxu0 %v1886
    %2193 = vmatprep.subr.bf16.mxu0 %v1891
    %2194 = vmatpush1.bf16.msra.mxu0 %v1890
    %2195 = vmatprep.subr.bf16.mxu0 %v1895
    %2196 = vmatpush1.bf16.msra.mxu0 %v1894
    %2197 = vmatprep.subr.bf16.mxu0 %v1899
    %2198 = vmatpush1.bf16.msra.mxu0 %v1898
    %2199 = vmatprep.subr.bf16.mxu0 %v1903
    %2200 = vmatpush1.bf16.msra.mxu0 %v1902
    %2201 = vmatprep.subr.bf16.mxu0 %v1907
    %2202 = vmatpush1.bf16.msra.mxu0 %v1906
    %2203 = vmatprep.subr.bf16.mxu0 %v1911
    %2204 = vmatpush1.bf16.msra.mxu0 %v1910
    %2205 = vmatprep.subr.bf16.mxu0 %v1915
    %2206 = vmatpush1.bf16.msra.mxu0 %v1914
    %2207 = vmatprep.subr.bf16.mxu0 %v1919
    %2208 = vmatpush1.bf16.msra.mxu0 %v1918
    %2209 = vmatprep.subr.bf16.mxu0 %v1923
    %2210 = vmatpush1.bf16.msra.mxu0 %v1922
    %2211 = vmatprep.subr.bf16.mxu0 %v1927
    %2212 = vmatpush1.bf16.msra.mxu0 %v1926
    %2213 = vmatprep.subr.bf16.mxu0 %v1931
    %2214 = vmatpush1.bf16.msra.mxu0 %v1930
    %2215 = vmatprep.mubr.bf16.mxu0 %v1269
    %2216 = vmatmul.mubr.bf16.gmra.mrb[0].mxu0 %v1268
    %v2217 = vpop.f32.mrb[0].mxu0
    %v2218 = vadd.f32 %v2177, %v2217
    %v2219 = vpop.f32.mrb[0].mxu0
    %v2220 = vadd.f32 %v2179, %v2219
    %v2221 = vpop.f32.mrb[0].mxu0
    %v2222 = vpop.f32.mrb[0].mxu0
    %2223 = vdwg.mxu0
    %v2224 = vxor.u32 %v2136, 2147483648
    %v2225 = vxor.u32 %v2138, 2147483648
    %v2226 = vxor.u32 %v2218, 2147483648
    %v2227 = vxor.u32 %v2220, 2147483648
    %v2228 = vmul.f32 %v2224, 1.442695
    %v2229 = vpow.pop %v2228
    %v2230 = vmul.f32 %v2225, 1.442695
    %v2231 = vpow.pop %v2230
    %v2232 = vmul.f32 %v2226, 1.442695
    %v2233 = vpow.pop %v2232
    %v2234 = vmul.f32 %v2227, 1.442695
    %v2235 = vpow.pop %v2234
    %v2236 = vadd.f32 %v2229, 1.0
    %v2237 = vadd.f32 %v2231, 1.0
    %v2238 = vadd.f32 %v2233, 1.0
    %v2239 = vadd.f32 %v2235, 1.0
    %v2240 = vrcp.pop %v2236
    %v2241 = vmul.f32 1.0, %v2240
    %v2242 = vrcp.pop %v2237
    %v2243 = vmul.f32 1.0, %v2242
    %v2244 = vrcp.pop %v2238
    %v2245 = vmul.f32 1.0, %v2244
    %v2246 = vrcp.pop %v2239
    %v2247 = vmul.f32 1.0, %v2246
    %v2248 = vmul.f32 %v2136, %v2241
    %v2249 = vmul.f32 %v2138, %v2243
    %v2250 = vmul.f32 %v2218, %v2245
    %v2251 = vmul.f32 %v2220, %v2247
    %v2252 = vpack.c.bf16 %v2248, %v2248
    %v2253 = vpack.c.bf16 %v2249, %v2249
    %v2254 = vpack.c.bf16 %v2250, %v2250
    %v2255 = vpack.c.bf16 %v2251, %v2251
    %v2256 = vld [vmem:[#allocation10] sm:$0xff]
    %v2257 = vld [vmem:[#allocation10 + $0x8] sm:$0xff]
    %v2258 = vld [vmem:[#allocation10 + $0x10] sm:$0xff]
    %v2259 = vld [vmem:[#allocation10 + $0x18] sm:$0xff]
    %v2260 = vld [vmem:[#allocation10 + $0x20] sm:$0xff]
    %v2261 = vld [vmem:[#allocation10 + $0x28] sm:$0xff]
    %v2262 = vld [vmem:[#allocation10 + $0x30] sm:$0xff]
    %v2263 = vld [vmem:[#allocation10 + $0x38] sm:$0xff]
    %v2264 = vld [vmem:[#allocation10 + $0x40] sm:$0xff]
    %v2265 = vld [vmem:[#allocation10 + $0x48] sm:$0xff]
    %v2266 = vld [vmem:[#allocation10 + $0x50] sm:$0xff]
    %v2267 = vld [vmem:[#allocation10 + $0x58] sm:$0xff]
    %v2268 = vld [vmem:[#allocation10 + $0x60] sm:$0xff]
    %v2269 = vld [vmem:[#allocation10 + $0x68] sm:$0xff]
    %v2270 = vld [vmem:[#allocation10 + $0x70] sm:$0xff]
    %v2271 = vld [vmem:[#allocation10 + $0x78] sm:$0xff]
    %v2272 = vld [vmem:[#allocation10 + $0x80] sm:$0xff]
    %v2273 = vld [vmem:[#allocation10 + $0x88] sm:$0xff]
    %v2274 = vld [vmem:[#allocation10 + $0x90] sm:$0xff]
    %v2275 = vld [vmem:[#allocation10 + $0x98] sm:$0xff]
    %v2276 = vld [vmem:[#allocation10 + $0xa0] sm:$0xff]
    %v2277 = vld [vmem:[#allocation10 + $0xa8] sm:$0xff]
    %v2278 = vld [vmem:[#allocation10 + $0xb0] sm:$0xff]
    %v2279 = vld [vmem:[#allocation10 + $0xb8] sm:$0xff]
    %v2280 = vld [vmem:[#allocation10 + $0xc0] sm:$0xff]
    %v2281 = vld [vmem:[#allocation10 + $0xc8] sm:$0xff]
    %v2282 = vld [vmem:[#allocation10 + $0xd0] sm:$0xff]
    %v2283 = vld [vmem:[#allocation10 + $0xd8] sm:$0xff]
    %v2284 = vld [vmem:[#allocation10 + $0xe0] sm:$0xff]
    %v2285 = vld [vmem:[#allocation10 + $0xe8] sm:$0xff]
    %v2286 = vld [vmem:[#allocation10 + $0xf0] sm:$0xff]
    %v2287 = vld [vmem:[#allocation10 + $0xf8] sm:$0xff]
    %v2288 = vld [vmem:[#allocation10 + $0x100] sm:$0xff]
    %v2289 = vld [vmem:[#allocation10 + $0x108] sm:$0xff]
    %v2290 = vld [vmem:[#allocation10 + $0x110] sm:$0xff]
    %v2291 = vld [vmem:[#allocation10 + $0x118] sm:$0xff]
    %v2292 = vld [vmem:[#allocation10 + $0x120] sm:$0xff]
    %v2293 = vld [vmem:[#allocation10 + $0x128] sm:$0xff]
    %v2294 = vld [vmem:[#allocation10 + $0x130] sm:$0xff]
    %v2295 = vld [vmem:[#allocation10 + $0x138] sm:$0xff]
    %v2296 = vld [vmem:[#allocation10 + $0x140] sm:$0xff]
    %v2297 = vld [vmem:[#allocation10 + $0x148] sm:$0xff]
    %v2298 = vld [vmem:[#allocation10 + $0x150] sm:$0xff]
    %v2299 = vld [vmem:[#allocation10 + $0x158] sm:$0xff]
    %v2300 = vld [vmem:[#allocation10 + $0x160] sm:$0xff]
    %v2301 = vld [vmem:[#allocation10 + $0x168] sm:$0xff]
    %v2302 = vld [vmem:[#allocation10 + $0x170] sm:$0xff]
    %v2303 = vld [vmem:[#allocation10 + $0x178] sm:$0xff]
    %v2304 = vld [vmem:[#allocation10 + $0x180] sm:$0xff]
    %v2305 = vld [vmem:[#allocation10 + $0x188] sm:$0xff]
    %v2306 = vld [vmem:[#allocation10 + $0x190] sm:$0xff]
    %v2307 = vld [vmem:[#allocation10 + $0x198] sm:$0xff]
    %v2308 = vld [vmem:[#allocation10 + $0x1a0] sm:$0xff]
    %v2309 = vld [vmem:[#allocation10 + $0x1a8] sm:$0xff]
    %v2310 = vld [vmem:[#allocation10 + $0x1b0] sm:$0xff]
    %v2311 = vld [vmem:[#allocation10 + $0x1b8] sm:$0xff]
    %v2312 = vld [vmem:[#allocation10 + $0x1c0] sm:$0xff]
    %v2313 = vld [vmem:[#allocation10 + $0x1c8] sm:$0xff]
    %v2314 = vld [vmem:[#allocation10 + $0x1d0] sm:$0xff]
    %v2315 = vld [vmem:[#allocation10 + $0x1d8] sm:$0xff]
    %v2316 = vld [vmem:[#allocation10 + $0x1e0] sm:$0xff]
    %v2317 = vld [vmem:[#allocation10 + $0x1e8] sm:$0xff]
    %v2318 = vld [vmem:[#allocation10 + $0x1f0] sm:$0xff]
    %v2319 = vld [vmem:[#allocation10 + $0x1f8] sm:$0xff]
    %v2320 = vld [vmem:[#allocation10 + $0x200] sm:$0xff]
    %v2321 = vld [vmem:[#allocation10 + $0x208] sm:$0xff]
    %v2322 = vld [vmem:[#allocation10 + $0x210] sm:$0xff]
    %v2323 = vld [vmem:[#allocation10 + $0x218] sm:$0xff]
    %v2324 = vld [vmem:[#allocation10 + $0x220] sm:$0xff]
    %v2325 = vld [vmem:[#allocation10 + $0x228] sm:$0xff]
    %v2326 = vld [vmem:[#allocation10 + $0x230] sm:$0xff]
    %v2327 = vld [vmem:[#allocation10 + $0x238] sm:$0xff]
    %v2328 = vld [vmem:[#allocation10 + $0x240] sm:$0xff]
    %v2329 = vld [vmem:[#allocation10 + $0x248] sm:$0xff]
    %v2330 = vld [vmem:[#allocation10 + $0x250] sm:$0xff]
    %v2331 = vld [vmem:[#allocation10 + $0x258] sm:$0xff]
    %v2332 = vld [vmem:[#allocation10 + $0x260] sm:$0xff]
    %v2333 = vld [vmem:[#allocation10 + $0x268] sm:$0xff]
    %v2334 = vld [vmem:[#allocation10 + $0x270] sm:$0xff]
    %v2335 = vld [vmem:[#allocation10 + $0x278] sm:$0xff]
    %v2336 = vld [vmem:[#allocation10 + $0x280] sm:$0xff]
    %v2337 = vld [vmem:[#allocation10 + $0x288] sm:$0xff]
    %v2338 = vld [vmem:[#allocation10 + $0x290] sm:$0xff]
    %v2339 = vld [vmem:[#allocation10 + $0x298] sm:$0xff]
    %v2340 = vld [vmem:[#allocation10 + $0x2a0] sm:$0xff]
    %v2341 = vld [vmem:[#allocation10 + $0x2a8] sm:$0xff]
    %v2342 = vld [vmem:[#allocation10 + $0x2b0] sm:$0xff]
    %v2343 = vld [vmem:[#allocation10 + $0x2b8] sm:$0xff]
    %v2344 = vld [vmem:[#allocation10 + $0x2c0] sm:$0xff]
    %v2345 = vld [vmem:[#allocation10 + $0x2c8] sm:$0xff]
    %v2346 = vld [vmem:[#allocation10 + $0x2d0] sm:$0xff]
    %v2347 = vld [vmem:[#allocation10 + $0x2d8] sm:$0xff]
    %v2348 = vld [vmem:[#allocation10 + $0x2e0] sm:$0xff]
    %v2349 = vld [vmem:[#allocation10 + $0x2e8] sm:$0xff]
    %v2350 = vld [vmem:[#allocation10 + $0x2f0] sm:$0xff]
    %v2351 = vld [vmem:[#allocation10 + $0x2f8] sm:$0xff]
    %v2352 = vld [vmem:[#allocation10 + $0x300] sm:$0xff]
    %v2353 = vld [vmem:[#allocation10 + $0x308] sm:$0xff]
    %v2354 = vld [vmem:[#allocation10 + $0x310] sm:$0xff]
    %v2355 = vld [vmem:[#allocation10 + $0x318] sm:$0xff]
    %v2356 = vld [vmem:[#allocation10 + $0x320] sm:$0xff]
    %v2357 = vld [vmem:[#allocation10 + $0x328] sm:$0xff]
    %v2358 = vld [vmem:[#allocation10 + $0x330] sm:$0xff]
    %v2359 = vld [vmem:[#allocation10 + $0x338] sm:$0xff]
    %v2360 = vld [vmem:[#allocation10 + $0x340] sm:$0xff]
    %v2361 = vld [vmem:[#allocation10 + $0x348] sm:$0xff]
    %v2362 = vld [vmem:[#allocation10 + $0x350] sm:$0xff]
    %v2363 = vld [vmem:[#allocation10 + $0x358] sm:$0xff]
    %v2364 = vld [vmem:[#allocation10 + $0x360] sm:$0xff]
    %v2365 = vld [vmem:[#allocation10 + $0x368] sm:$0xff]
    %v2366 = vld [vmem:[#allocation10 + $0x370] sm:$0xff]
    %v2367 = vld [vmem:[#allocation10 + $0x378] sm:$0xff]
    %v2368 = vld [vmem:[#allocation10 + $0x380] sm:$0xff]
    %v2369 = vld [vmem:[#allocation10 + $0x388] sm:$0xff]
    %v2370 = vld [vmem:[#allocation10 + $0x390] sm:$0xff]
    %v2371 = vld [vmem:[#allocation10 + $0x398] sm:$0xff]
    %v2372 = vld [vmem:[#allocation10 + $0x3a0] sm:$0xff]
    %v2373 = vld [vmem:[#allocation10 + $0x3a8] sm:$0xff]
    %v2374 = vld [vmem:[#allocation10 + $0x3b0] sm:$0xff]
    %v2375 = vld [vmem:[#allocation10 + $0x3b8] sm:$0xff]
    %v2376 = vld [vmem:[#allocation10 + $0x3c0] sm:$0xff]
    %v2377 = vld [vmem:[#allocation10 + $0x3c8] sm:$0xff]
    %v2378 = vld [vmem:[#allocation10 + $0x3d0] sm:$0xff]
    %v2379 = vld [vmem:[#allocation10 + $0x3d8] sm:$0xff]
    %v2380 = vld [vmem:[#allocation10 + $0x3e0] sm:$0xff]
    %v2381 = vld [vmem:[#allocation10 + $0x3e8] sm:$0xff]
    %v2382 = vld [vmem:[#allocation10 + $0x3f0] sm:$0xff]
    %v2383 = vld [vmem:[#allocation10 + $0x3f8] sm:$0xff]
    %v2384 = vld [vmem:[%s8] sm:$0xf]
    %v2386 = vlaneseq
    %v2387 = vshrl.u32 %v2386, 7
    %v2388 = vsub.s32 0, %v2387
    %v2389 = vrot.slane %v2384, %v2388
    %v2390 = vlaneseq
    %v2391 = vshrl.u32 %v2390, 7
    %v2392 = vsub.s32 1, %v2391
    %v2393 = vrot.slane %v2384, %v2392
    %v2394 = vlaneseq
    %v2395 = vshrl.u32 %v2394, 7
    %v2396 = vsub.s32 2, %v2395
    %v2397 = vrot.slane %v2384, %v2396
    %v2398 = vlaneseq
    %v2399 = vshrl.u32 %v2398, 7
    %v2400 = vsub.s32 3, %v2399
    %v2401 = vrot.slane %v2384, %v2400
    %v2534 = vunpack.c.l.b16 %v2256
    %v2535 = vunpack.c.h.b16 %v2256
    %v2536 = vunpack.c.l.b16 %v2257
    %v2537 = vunpack.c.h.b16 %v2257
    %v2538 = vunpack.c.l.b16 %v2258
    %v2539 = vunpack.c.h.b16 %v2258
    %v2540 = vunpack.c.l.b16 %v2259
    %v2541 = vunpack.c.h.b16 %v2259
    %v2542 = vunpack.c.l.b16 %v2260
    %v2543 = vunpack.c.h.b16 %v2260
    %v2544 = vunpack.c.l.b16 %v2261
    %v2545 = vunpack.c.h.b16 %v2261
    %v2546 = vunpack.c.l.b16 %v2262
    %v2547 = vunpack.c.h.b16 %v2262
    %v2548 = vunpack.c.l.b16 %v2263
    %v2549 = vunpack.c.h.b16 %v2263
    %v2550 = vunpack.c.l.b16 %v2264
    %v2551 = vunpack.c.h.b16 %v2264
    %v2552 = vunpack.c.l.b16 %v2265
    %v2553 = vunpack.c.h.b16 %v2265
    %v2554 = vunpack.c.l.b16 %v2266
    %v2555 = vunpack.c.h.b16 %v2266
    %v2556 = vunpack.c.l.b16 %v2267
    %v2557 = vunpack.c.h.b16 %v2267
    %v2558 = vunpack.c.l.b16 %v2268
    %v2559 = vunpack.c.h.b16 %v2268
    %v2560 = vunpack.c.l.b16 %v2269
    %v2561 = vunpack.c.h.b16 %v2269
    %v2562 = vunpack.c.l.b16 %v2270
    %v2563 = vunpack.c.h.b16 %v2270
    %v2564 = vunpack.c.l.b16 %v2271
    %v2565 = vunpack.c.h.b16 %v2271
    %v2566 = vunpack.c.l.b16 %v2272
    %v2567 = vunpack.c.h.b16 %v2272
    %v2568 = vunpack.c.l.b16 %v2273
    %v2569 = vunpack.c.h.b16 %v2273
    %v2570 = vunpack.c.l.b16 %v2274
    %v2571 = vunpack.c.h.b16 %v2274
    %v2572 = vunpack.c.l.b16 %v2275
    %v2573 = vunpack.c.h.b16 %v2275
    %v2574 = vunpack.c.l.b16 %v2276
    %v2575 = vunpack.c.h.b16 %v2276
    %v2576 = vunpack.c.l.b16 %v2277
    %v2577 = vunpack.c.h.b16 %v2277
    %v2578 = vunpack.c.l.b16 %v2278
    %v2579 = vunpack.c.h.b16 %v2278
    %v2580 = vunpack.c.l.b16 %v2279
    %v2581 = vunpack.c.h.b16 %v2279
    %v2582 = vunpack.c.l.b16 %v2280
    %v2583 = vunpack.c.h.b16 %v2280
    %v2584 = vunpack.c.l.b16 %v2281
    %v2585 = vunpack.c.h.b16 %v2281
    %v2586 = vunpack.c.l.b16 %v2282
    %v2587 = vunpack.c.h.b16 %v2282
    %v2588 = vunpack.c.l.b16 %v2283
    %v2589 = vunpack.c.h.b16 %v2283
    %v2590 = vunpack.c.l.b16 %v2284
    %v2591 = vunpack.c.h.b16 %v2284
    %v2592 = vunpack.c.l.b16 %v2285
    %v2593 = vunpack.c.h.b16 %v2285
    %v2594 = vunpack.c.l.b16 %v2286
    %v2595 = vunpack.c.h.b16 %v2286
    %v2596 = vunpack.c.l.b16 %v2287
    %v2597 = vunpack.c.h.b16 %v2287
    %v2598 = vunpack.c.l.b16 %v2288
    %v2599 = vunpack.c.h.b16 %v2288
    %v2600 = vunpack.c.l.b16 %v2289
    %v2601 = vunpack.c.h.b16 %v2289
    %v2602 = vunpack.c.l.b16 %v2290
    %v2603 = vunpack.c.h.b16 %v2290
    %v2604 = vunpack.c.l.b16 %v2291
    %v2605 = vunpack.c.h.b16 %v2291
    %v2606 = vunpack.c.l.b16 %v2292
    %v2607 = vunpack.c.h.b16 %v2292
    %v2608 = vunpack.c.l.b16 %v2293
    %v2609 = vunpack.c.h.b16 %v2293
    %v2610 = vunpack.c.l.b16 %v2294
    %v2611 = vunpack.c.h.b16 %v2294
    %v2612 = vunpack.c.l.b16 %v2295
    %v2613 = vunpack.c.h.b16 %v2295
    %v2614 = vunpack.c.l.b16 %v2296
    %v2615 = vunpack.c.h.b16 %v2296
    %v2616 = vunpack.c.l.b16 %v2297
    %v2617 = vunpack.c.h.b16 %v2297
    %v2618 = vunpack.c.l.b16 %v2298
    %v2619 = vunpack.c.h.b16 %v2298
    %v2620 = vunpack.c.l.b16 %v2299
    %v2621 = vunpack.c.h.b16 %v2299
    %v2622 = vunpack.c.l.b16 %v2300
    %v2623 = vunpack.c.h.b16 %v2300
    %v2624 = vunpack.c.l.b16 %v2301
    %v2625 = vunpack.c.h.b16 %v2301
    %v2626 = vunpack.c.l.b16 %v2302
    %v2627 = vunpack.c.h.b16 %v2302
    %v2628 = vunpack.c.l.b16 %v2303
    %v2629 = vunpack.c.h.b16 %v2303
    %v2630 = vunpack.c.l.b16 %v2304
    %v2631 = vunpack.c.h.b16 %v2304
    %v2632 = vunpack.c.l.b16 %v2305
    %v2633 = vunpack.c.h.b16 %v2305
    %v2634 = vunpack.c.l.b16 %v2306
    %v2635 = vunpack.c.h.b16 %v2306
    %v2636 = vunpack.c.l.b16 %v2307
    %v2637 = vunpack.c.h.b16 %v2307
    %v2638 = vunpack.c.l.b16 %v2308
    %v2639 = vunpack.c.h.b16 %v2308
    %v2640 = vunpack.c.l.b16 %v2309
    %v2641 = vunpack.c.h.b16 %v2309
    %v2642 = vunpack.c.l.b16 %v2310
    %v2643 = vunpack.c.h.b16 %v2310
    %v2644 = vunpack.c.l.b16 %v2311
    %v2645 = vunpack.c.h.b16 %v2311
    %v2646 = vunpack.c.l.b16 %v2312
    %v2647 = vunpack.c.h.b16 %v2312
    %v2648 = vunpack.c.l.b16 %v2313
    %v2649 = vunpack.c.h.b16 %v2313
    %v2650 = vunpack.c.l.b16 %v2314
    %v2651 = vunpack.c.h.b16 %v2314
    %v2652 = vunpack.c.l.b16 %v2315
    %v2653 = vunpack.c.h.b16 %v2315
    %v2654 = vunpack.c.l.b16 %v2316
    %v2655 = vunpack.c.h.b16 %v2316
    %v2656 = vunpack.c.l.b16 %v2317
    %v2657 = vunpack.c.h.b16 %v2317
    %v2658 = vunpack.c.l.b16 %v2318
    %v2659 = vunpack.c.h.b16 %v2318
    %v2660 = vunpack.c.l.b16 %v2319
    %v2661 = vunpack.c.h.b16 %v2319
    %v2662 = vunpack.c.l.b16 %v2320
    %v2663 = vunpack.c.h.b16 %v2320
    %v2664 = vunpack.c.l.b16 %v2321
    %v2665 = vunpack.c.h.b16 %v2321
    %v2666 = vunpack.c.l.b16 %v2322
    %v2667 = vunpack.c.h.b16 %v2322
    %v2668 = vunpack.c.l.b16 %v2323
    %v2669 = vunpack.c.h.b16 %v2323
    %v2670 = vunpack.c.l.b16 %v2324
    %v2671 = vunpack.c.h.b16 %v2324
    %v2672 = vunpack.c.l.b16 %v2325
    %v2673 = vunpack.c.h.b16 %v2325
    %v2674 = vunpack.c.l.b16 %v2326
    %v2675 = vunpack.c.h.b16 %v2326
    %v2676 = vunpack.c.l.b16 %v2327
    %v2677 = vunpack.c.h.b16 %v2327
    %v2678 = vunpack.c.l.b16 %v2328
    %v2679 = vunpack.c.h.b16 %v2328
    %v2680 = vunpack.c.l.b16 %v2329
    %v2681 = vunpack.c.h.b16 %v2329
    %v2682 = vunpack.c.l.b16 %v2330
    %v2683 = vunpack.c.h.b16 %v2330
    %v2684 = vunpack.c.l.b16 %v2331
    %v2685 = vunpack.c.h.b16 %v2331
    %v2686 = vunpack.c.l.b16 %v2332
    %v2687 = vunpack.c.h.b16 %v2332
    %v2688 = vunpack.c.l.b16 %v2333
    %v2689 = vunpack.c.h.b16 %v2333
    %v2690 = vunpack.c.l.b16 %v2334
    %v2691 = vunpack.c.h.b16 %v2334
    %v2692 = vunpack.c.l.b16 %v2335
    %v2693 = vunpack.c.h.b16 %v2335
    %v2694 = vunpack.c.l.b16 %v2336
    %v2695 = vunpack.c.h.b16 %v2336
    %v2696 = vunpack.c.l.b16 %v2337
    %v2697 = vunpack.c.h.b16 %v2337
    %v2698 = vunpack.c.l.b16 %v2338
    %v2699 = vunpack.c.h.b16 %v2338
    %v2700 = vunpack.c.l.b16 %v2339
    %v2701 = vunpack.c.h.b16 %v2339
    %v2702 = vunpack.c.l.b16 %v2340
    %v2703 = vunpack.c.h.b16 %v2340
    %v2704 = vunpack.c.l.b16 %v2341
    %v2705 = vunpack.c.h.b16 %v2341
    %v2706 = vunpack.c.l.b16 %v2342
    %v2707 = vunpack.c.h.b16 %v2342
    %v2708 = vunpack.c.l.b16 %v2343
    %v2709 = vunpack.c.h.b16 %v2343
    %v2710 = vunpack.c.l.b16 %v2344
    %v2711 = vunpack.c.h.b16 %v2344
    %v2712 = vunpack.c.l.b16 %v2345
    %v2713 = vunpack.c.h.b16 %v2345
    %v2714 = vunpack.c.l.b16 %v2346
    %v2715 = vunpack.c.h.b16 %v2346
    %v2716 = vunpack.c.l.b16 %v2347
    %v2717 = vunpack.c.h.b16 %v2347
    %v2718 = vunpack.c.l.b16 %v2348
    %v2719 = vunpack.c.h.b16 %v2348
    %v2720 = vunpack.c.l.b16 %v2349
    %v2721 = vunpack.c.h.b16 %v2349
    %v2722 = vunpack.c.l.b16 %v2350
    %v2723 = vunpack.c.h.b16 %v2350
    %v2724 = vunpack.c.l.b16 %v2351
    %v2725 = vunpack.c.h.b16 %v2351
    %v2726 = vunpack.c.l.b16 %v2352
    %v2727 = vunpack.c.h.b16 %v2352
    %v2728 = vunpack.c.l.b16 %v2353
    %v2729 = vunpack.c.h.b16 %v2353
    %v2730 = vunpack.c.l.b16 %v2354
    %v2731 = vunpack.c.h.b16 %v2354
    %v2732 = vunpack.c.l.b16 %v2355
    %v2733 = vunpack.c.h.b16 %v2355
    %v2734 = vunpack.c.l.b16 %v2356
    %v2735 = vunpack.c.h.b16 %v2356
    %v2736 = vunpack.c.l.b16 %v2357
    %v2737 = vunpack.c.h.b16 %v2357
    %v2738 = vunpack.c.l.b16 %v2358
    %v2739 = vunpack.c.h.b16 %v2358
    %v2740 = vunpack.c.l.b16 %v2359
    %v2741 = vunpack.c.h.b16 %v2359
    %v2742 = vunpack.c.l.b16 %v2360
    %v2743 = vunpack.c.h.b16 %v2360
    %v2744 = vunpack.c.l.b16 %v2361
    %v2745 = vunpack.c.h.b16 %v2361
    %v2746 = vunpack.c.l.b16 %v2362
    %v2747 = vunpack.c.h.b16 %v2362
    %v2748 = vunpack.c.l.b16 %v2363
    %v2749 = vunpack.c.h.b16 %v2363
    %v2750 = vunpack.c.l.b16 %v2364
    %v2751 = vunpack.c.h.b16 %v2364
    %v2752 = vunpack.c.l.b16 %v2365
    %v2753 = vunpack.c.h.b16 %v2365
    %v2754 = vunpack.c.l.b16 %v2366
    %v2755 = vunpack.c.h.b16 %v2366
    %v2756 = vunpack.c.l.b16 %v2367
    %v2757 = vunpack.c.h.b16 %v2367
    %v2758 = vunpack.c.l.b16 %v2368
    %v2759 = vunpack.c.h.b16 %v2368
    %v2760 = vunpack.c.l.b16 %v2369
    %v2761 = vunpack.c.h.b16 %v2369
    %v2762 = vunpack.c.l.b16 %v2370
    %v2763 = vunpack.c.h.b16 %v2370
    %v2764 = vunpack.c.l.b16 %v2371
    %v2765 = vunpack.c.h.b16 %v2371
    %v2766 = vunpack.c.l.b16 %v2372
    %v2767 = vunpack.c.h.b16 %v2372
    %v2768 = vunpack.c.l.b16 %v2373
    %v2769 = vunpack.c.h.b16 %v2373
    %v2770 = vunpack.c.l.b16 %v2374
    %v2771 = vunpack.c.h.b16 %v2374
    %v2772 = vunpack.c.l.b16 %v2375
    %v2773 = vunpack.c.h.b16 %v2375
    %v2774 = vunpack.c.l.b16 %v2376
    %v2775 = vunpack.c.h.b16 %v2376
    %v2776 = vunpack.c.l.b16 %v2377
    %v2777 = vunpack.c.h.b16 %v2377
    %v2778 = vunpack.c.l.b16 %v2378
    %v2779 = vunpack.c.h.b16 %v2378
    %v2780 = vunpack.c.l.b16 %v2379
    %v2781 = vunpack.c.h.b16 %v2379
    %v2782 = vunpack.c.l.b16 %v2380
    %v2783 = vunpack.c.h.b16 %v2380
    %v2784 = vunpack.c.l.b16 %v2381
    %v2785 = vunpack.c.h.b16 %v2381
    %v2786 = vunpack.c.l.b16 %v2382
    %v2787 = vunpack.c.h.b16 %v2382
    %v2788 = vunpack.c.l.b16 %v2383
    %v2789 = vunpack.c.h.b16 %v2383
    %v2790 = vpack.c.b16 %v2538, %v2534
    %v2791 = vpack.c.b16 %v2539, %v2535
    %v2792 = vpack.c.b16 %v2540, %v2536
    %v2793 = vpack.c.b16 %v2541, %v2537
    %v2794 = vpack.c.b16 %v2546, %v2542
    %v2795 = vpack.c.b16 %v2547, %v2543
    %v2796 = vpack.c.b16 %v2548, %v2544
    %v2797 = vpack.c.b16 %v2549, %v2545
    %v2798 = vpack.c.b16 %v2554, %v2550
    %v2799 = vpack.c.b16 %v2555, %v2551
    %v2800 = vpack.c.b16 %v2556, %v2552
    %v2801 = vpack.c.b16 %v2557, %v2553
    %v2802 = vpack.c.b16 %v2562, %v2558
    %v2803 = vpack.c.b16 %v2563, %v2559
    %v2804 = vpack.c.b16 %v2564, %v2560
    %v2805 = vpack.c.b16 %v2565, %v2561
    %v2806 = vpack.c.b16 %v2570, %v2566
    %v2807 = vpack.c.b16 %v2571, %v2567
    %v2808 = vpack.c.b16 %v2572, %v2568
    %v2809 = vpack.c.b16 %v2573, %v2569
    %v2810 = vpack.c.b16 %v2578, %v2574
    %v2811 = vpack.c.b16 %v2579, %v2575
    %v2812 = vpack.c.b16 %v2580, %v2576
    %v2813 = vpack.c.b16 %v2581, %v2577
    %v2814 = vpack.c.b16 %v2586, %v2582
    %v2815 = vpack.c.b16 %v2587, %v2583
    %v2816 = vpack.c.b16 %v2588, %v2584
    %v2817 = vpack.c.b16 %v2589, %v2585
    %v2818 = vpack.c.b16 %v2594, %v2590
    %v2819 = vpack.c.b16 %v2595, %v2591
    %v2820 = vpack.c.b16 %v2596, %v2592
    %v2821 = vpack.c.b16 %v2597, %v2593
    %v2822 = vpack.c.b16 %v2602, %v2598
    %v2823 = vpack.c.b16 %v2603, %v2599
    %v2824 = vpack.c.b16 %v2604, %v2600
    %v2825 = vpack.c.b16 %v2605, %v2601
    %v2826 = vpack.c.b16 %v2610, %v2606
    %v2827 = vpack.c.b16 %v2611, %v2607
    %v2828 = vpack.c.b16 %v2612, %v2608
    %v2829 = vpack.c.b16 %v2613, %v2609
    %v2830 = vpack.c.b16 %v2618, %v2614
    %v2831 = vpack.c.b16 %v2619, %v2615
    %v2832 = vpack.c.b16 %v2620, %v2616
    %v2833 = vpack.c.b16 %v2621, %v2617
    %v2834 = vpack.c.b16 %v2626, %v2622
    %v2835 = vpack.c.b16 %v2627, %v2623
    %v2836 = vpack.c.b16 %v2628, %v2624
    %v2837 = vpack.c.b16 %v2629, %v2625
    %v2838 = vpack.c.b16 %v2634, %v2630
    %v2839 = vpack.c.b16 %v2635, %v2631
    %v2840 = vpack.c.b16 %v2636, %v2632
    %v2841 = vpack.c.b16 %v2637, %v2633
    %v2842 = vpack.c.b16 %v2642, %v2638
    %v2843 = vpack.c.b16 %v2643, %v2639
    %v2844 = vpack.c.b16 %v2644, %v2640
    %v2845 = vpack.c.b16 %v2645, %v2641
    %v2846 = vpack.c.b16 %v2650, %v2646
    %v2847 = vpack.c.b16 %v2651, %v2647
    %v2848 = vpack.c.b16 %v2652, %v2648
    %v2849 = vpack.c.b16 %v2653, %v2649
    %v2850 = vpack.c.b16 %v2658, %v2654
    %v2851 = vpack.c.b16 %v2659, %v2655
    %v2852 = vpack.c.b16 %v2660, %v2656
    %v2853 = vpack.c.b16 %v2661, %v2657
    %v2854 = vpack.c.b16 %v2666, %v2662
    %v2855 = vpack.c.b16 %v2667, %v2663
    %v2856 = vpack.c.b16 %v2668, %v2664
    %v2857 = vpack.c.b16 %v2669, %v2665
    %v2858 = vpack.c.b16 %v2674, %v2670
    %v2859 = vpack.c.b16 %v2675, %v2671
    %v2860 = vpack.c.b16 %v2676, %v2672
    %v2861 = vpack.c.b16 %v2677, %v2673
    %v2862 = vpack.c.b16 %v2682, %v2678
    %v2863 = vpack.c.b16 %v2683, %v2679
    %v2864 = vpack.c.b16 %v2684, %v2680
    %v2865 = vpack.c.b16 %v2685, %v2681
    %v2866 = vpack.c.b16 %v2690, %v2686
    %v2867 = vpack.c.b16 %v2691, %v2687
    %v2868 = vpack.c.b16 %v2692, %v2688
    %v2869 = vpack.c.b16 %v2693, %v2689
    %v2870 = vpack.c.b16 %v2698, %v2694
    %v2871 = vpack.c.b16 %v2699, %v2695
    %v2872 = vpack.c.b16 %v2700, %v2696
    %v2873 = vpack.c.b16 %v2701, %v2697
    %v2874 = vpack.c.b16 %v2706, %v2702
    %v2875 = vpack.c.b16 %v2707, %v2703
    %v2876 = vpack.c.b16 %v2708, %v2704
    %v2877 = vpack.c.b16 %v2709, %v2705
    %v2878 = vpack.c.b16 %v2714, %v2710
    %v2879 = vpack.c.b16 %v2715, %v2711
    %v2880 = vpack.c.b16 %v2716, %v2712
    %v2881 = vpack.c.b16 %v2717, %v2713
    %v2882 = vpack.c.b16 %v2722, %v2718
    %v2883 = vpack.c.b16 %v2723, %v2719
    %v2884 = vpack.c.b16 %v2724, %v2720
    %v2885 = vpack.c.b16 %v2725, %v2721
    %v2886 = vpack.c.b16 %v2730, %v2726
    %v2887 = vpack.c.b16 %v2731, %v2727
    %v2888 = vpack.c.b16 %v2732, %v2728
    %v2889 = vpack.c.b16 %v2733, %v2729
    %v2890 = vpack.c.b16 %v2738, %v2734
    %v2891 = vpack.c.b16 %v2739, %v2735
    %v2892 = vpack.c.b16 %v2740, %v2736
    %v2893 = vpack.c.b16 %v2741, %v2737
    %v2894 = vpack.c.b16 %v2746, %v2742
    %v2895 = vpack.c.b16 %v2747, %v2743
    %v2896 = vpack.c.b16 %v2748, %v2744
    %v2897 = vpack.c.b16 %v2749, %v2745
    %v2898 = vpack.c.b16 %v2754, %v2750
    %v2899 = vpack.c.b16 %v2755, %v2751
    %v2900 = vpack.c.b16 %v2756, %v2752
    %v2901 = vpack.c.b16 %v2757, %v2753
    %v2902 = vpack.c.b16 %v2762, %v2758
    %v2903 = vpack.c.b16 %v2763, %v2759
    %v2904 = vpack.c.b16 %v2764, %v2760
    %v2905 = vpack.c.b16 %v2765, %v2761
    %v2906 = vpack.c.b16 %v2770, %v2766
    %v2907 = vpack.c.b16 %v2771, %v2767
    %v2908 = vpack.c.b16 %v2772, %v2768
    %v2909 = vpack.c.b16 %v2773, %v2769
    %v2910 = vpack.c.b16 %v2778, %v2774
    %v2911 = vpack.c.b16 %v2779, %v2775
    %v2912 = vpack.c.b16 %v2780, %v2776
    %v2913 = vpack.c.b16 %v2781, %v2777
    %v2914 = vpack.c.b16 %v2786, %v2782
    %v2915 = vpack.c.b16 %v2787, %v2783
    %v2916 = vpack.c.b16 %v2788, %v2784
    %v2917 = vpack.c.b16 %v2789, %v2785
    %3046 = vmatprep.subr.bf16.mxu0 %v2791
    %3047 = vmatpush1.bf16.msra.mxu0 %v2790
    %3048 = vmatprep.subr.bf16.mxu0 %v2795
    %3049 = vmatpush1.bf16.msra.mxu0 %v2794
    %3050 = vmatprep.subr.bf16.mxu0 %v2799
    %3051 = vmatpush1.bf16.msra.mxu0 %v2798
    %3052 = vmatprep.subr.bf16.mxu0 %v2803
    %3053 = vmatpush1.bf16.msra.mxu0 %v2802
    %3054 = vmatprep.subr.bf16.mxu0 %v2807
    %3055 = vmatpush1.bf16.msra.mxu0 %v2806
    %3056 = vmatprep.subr.bf16.mxu0 %v2811
    %3057 = vmatpush1.bf16.msra.mxu0 %v2810
    %3058 = vmatprep.subr.bf16.mxu0 %v2815
    %3059 = vmatpush1.bf16.msra.mxu0 %v2814
    %3060 = vmatprep.subr.bf16.mxu0 %v2819
    %3061 = vmatpush1.bf16.msra.mxu0 %v2818
    %3062 = vmatprep.subr.bf16.mxu0 %v2823
    %3063 = vmatpush1.bf16.msra.mxu0 %v2822
    %3064 = vmatprep.subr.bf16.mxu0 %v2827
    %3065 = vmatpush1.bf16.msra.mxu0 %v2826
    %3066 = vmatprep.subr.bf16.mxu0 %v2831
    %3067 = vmatpush1.bf16.msra.mxu0 %v2830
    %3068 = vmatprep.subr.bf16.mxu0 %v2835
    %3069 = vmatpush1.bf16.msra.mxu0 %v2834
    %3070 = vmatprep.subr.bf16.mxu0 %v2839
    %3071 = vmatpush1.bf16.msra.mxu0 %v2838
    %3072 = vmatprep.subr.bf16.mxu0 %v2843
    %3073 = vmatpush1.bf16.msra.mxu0 %v2842
    %3074 = vmatprep.subr.bf16.mxu0 %v2847
    %3075 = vmatpush1.bf16.msra.mxu0 %v2846
    %3076 = vmatprep.subr.bf16.mxu0 %v2851
    %3077 = vmatpush1.bf16.msra.mxu0 %v2850
    %3078 = vmatprep.mubr.bf16.mxu0 %v2253
    %3079 = vmatmul.mubr.bf16.gmra.mrb[0].mxu0 %v2252
    %v3080 = vpop.f32.mrb[0].mxu0
    %v3081 = vadd.f32 %v2389, %v3080
    %v3082 = vpop.f32.mrb[0].mxu0
    %v3083 = vadd.f32 %v2393, %v3082
    %v3084 = vpop.f32.mrb[0].mxu0
    %v3085 = vpop.f32.mrb[0].mxu0
    %3086 = vdwg.mxu0
    %3087 = vmatprep.subr.bf16.mxu0 %v2855
    %3088 = vmatpush1.bf16.msra.mxu0 %v2854
    %3089 = vmatprep.subr.bf16.mxu0 %v2859
    %3090 = vmatpush1.bf16.msra.mxu0 %v2858
    %3091 = vmatprep.subr.bf16.mxu0 %v2863
    %3092 = vmatpush1.bf16.msra.mxu0 %v2862
    %3093 = vmatprep.subr.bf16.mxu0 %v2867
    %3094 = vmatpush1.bf16.msra.mxu0 %v2866
    %3095 = vmatprep.subr.bf16.mxu0 %v2871
    %3096 = vmatpush1.bf16.msra.mxu0 %v2870
    %3097 = vmatprep.subr.bf16.mxu0 %v2875
    %3098 = vmatpush1.bf16.msra.mxu0 %v2874
    %3099 = vmatprep.subr.bf16.mxu0 %v2879
    %3100 = vmatpush1.bf16.msra.mxu0 %v2878
    %3101 = vmatprep.subr.bf16.mxu0 %v2883
    %3102 = vmatpush1.bf16.msra.mxu0 %v2882
    %3103 = vmatprep.subr.bf16.mxu0 %v2887
    %3104 = vmatpush1.bf16.msra.mxu0 %v2886
    %3105 = vmatprep.subr.bf16.mxu0 %v2891
    %3106 = vmatpush1.bf16.msra.mxu0 %v2890
    %3107 = vmatprep.subr.bf16.mxu0 %v2895
    %3108 = vmatpush1.bf16.msra.mxu0 %v2894
    %3109 = vmatprep.subr.bf16.mxu0 %v2899
    %3110 = vmatpush1.bf16.msra.mxu0 %v2898
    %3111 = vmatprep.subr.bf16.mxu0 %v2903
    %3112 = vmatpush1.bf16.msra.mxu0 %v2902
    %3113 = vmatprep.subr.bf16.mxu0 %v2907
    %3114 = vmatpush1.bf16.msra.mxu0 %v2906
    %3115 = vmatprep.subr.bf16.mxu0 %v2911
    %3116 = vmatpush1.bf16.msra.mxu0 %v2910
    %3117 = vmatprep.subr.bf16.mxu0 %v2915
    %3118 = vmatpush1.bf16.msra.mxu0 %v2914
    %3119 = vmatprep.mubr.bf16.mxu0 %v2255
    %3120 = vmatmul.mubr.bf16.gmra.mrb[0].mxu0 %v2254
    %v3121 = vpop.f32.mrb[0].mxu0
    %v3122 = vadd.f32 %v3081, %v3121
    %v3123 = vpop.f32.mrb[0].mxu0
    %v3124 = vadd.f32 %v3083, %v3123
    %v3125 = vpop.f32.mrb[0].mxu0
    %v3126 = vpop.f32.mrb[0].mxu0
    %3127 = vdwg.mxu0
    %3128 = vmatprep.subr.bf16.mxu0 %v2793
    %3129 = vmatpush1.bf16.msra.mxu0 %v2792
    %3130 = vmatprep.subr.bf16.mxu0 %v2797
    %3131 = vmatpush1.bf16.msra.mxu0 %v2796
    %3132 = vmatprep.subr.bf16.mxu0 %v2801
    %3133 = vmatpush1.bf16.msra.mxu0 %v2800
    %3134 = vmatprep.subr.bf16.mxu0 %v2805
    %3135 = vmatpush1.bf16.msra.mxu0 %v2804
    %3136 = vmatprep.subr.bf16.mxu0 %v2809
    %3137 = vmatpush1.bf16.msra.mxu0 %v2808
    %3138 = vmatprep.subr.bf16.mxu0 %v2813
    %3139 = vmatpush1.bf16.msra.mxu0 %v2812
    %3140 = vmatprep.subr.bf16.mxu0 %v2817
    %3141 = vmatpush1.bf16.msra.mxu0 %v2816
    %3142 = vmatprep.subr.bf16.mxu0 %v2821
    %3143 = vmatpush1.bf16.msra.mxu0 %v2820
    %3144 = vmatprep.subr.bf16.mxu0 %v2825
    %3145 = vmatpush1.bf16.msra.mxu0 %v2824
    %3146 = vmatprep.subr.bf16.mxu0 %v2829
    %3147 = vmatpush1.bf16.msra.mxu0 %v2828
    %3148 = vmatprep.subr.bf16.mxu0 %v2833
    %3149 = vmatpush1.bf16.msra.mxu0 %v2832
    %3150 = vmatprep.subr.bf16.mxu0 %v2837
    %3151 = vmatpush1.bf16.msra.mxu0 %v2836
    %3152 = vmatprep.subr.bf16.mxu0 %v2841
    %3153 = vmatpush1.bf16.msra.mxu0 %v2840
    %3154 = vmatprep.subr.bf16.mxu0 %v2845
    %3155 = vmatpush1.bf16.msra.mxu0 %v2844
    %3156 = vmatprep.subr.bf16.mxu0 %v2849
    %3157 = vmatpush1.bf16.msra.mxu0 %v2848
    %3158 = vmatprep.subr.bf16.mxu0 %v2853
    %3159 = vmatpush1.bf16.msra.mxu0 %v2852
    %3160 = vmatprep.mubr.bf16.mxu0 %v2253
    %3161 = vmatmul.mubr.bf16.gmra.mrb[0].mxu0 %v2252
    %v3162 = vpop.f32.mrb[0].mxu0
    %v3163 = vadd.f32 %v2397, %v3162
    %v3164 = vpop.f32.mrb[0].mxu0
    %v3165 = vadd.f32 %v2401, %v3164
    %v3166 = vpop.f32.mrb[0].mxu0
    %v3167 = vpop.f32.mrb[0].mxu0
    %3168 = vdwg.mxu0
    %3169 = vmatprep.subr.bf16.mxu0 %v2857
    %3170 = vmatpush1.bf16.msra.mxu0 %v2856
    %3171 = vmatprep.subr.bf16.mxu0 %v2861
    %3172 = vmatpush1.bf16.msra.mxu0 %v2860
    %3173 = vmatprep.subr.bf16.mxu0 %v2865
    %3174 = vmatpush1.bf16.msra.mxu0 %v2864
    %3175 = vmatprep.subr.bf16.mxu0 %v2869
    %3176 = vmatpush1.bf16.msra.mxu0 %v2868
    %3177 = vmatprep.subr.bf16.mxu0 %v2873
    %3178 = vmatpush1.bf16.msra.mxu0 %v2872
    %3179 = vmatprep.subr.bf16.mxu0 %v2877
    %3180 = vmatpush1.bf16.msra.mxu0 %v2876
    %3181 = vmatprep.subr.bf16.mxu0 %v2881
    %3182 = vmatpush1.bf16.msra.mxu0 %v2880
    %3183 = vmatprep.subr.bf16.mxu0 %v2885
    %3184 = vmatpush1.bf16.msra.mxu0 %v2884
    %3185 = vmatprep.subr.bf16.mxu0 %v2889
    %3186 = vmatpush1.bf16.msra.mxu0 %v2888
    %3187 = vmatprep.subr.bf16.mxu0 %v2893
    %3188 = vmatpush1.bf16.msra.mxu0 %v2892
    %3189 = vmatprep.subr.bf16.mxu0 %v2897
    %3190 = vmatpush1.bf16.msra.mxu0 %v2896
    %3191 = vmatprep.subr.bf16.mxu0 %v2901
    %3192 = vmatpush1.bf16.msra.mxu0 %v2900
    %3193 = vmatprep.subr.bf16.mxu0 %v2905
    %3194 = vmatpush1.bf16.msra.mxu0 %v2904
    %3195 = vmatprep.subr.bf16.mxu0 %v2909
    %3196 = vmatpush1.bf16.msra.mxu0 %v2908
    %3197 = vmatprep.subr.bf16.mxu0 %v2913
    %3198 = vmatpush1.bf16.msra.mxu0 %v2912
    %3199 = vmatprep.subr.bf16.mxu0 %v2917
    %3200 = vmatpush1.bf16.msra.mxu0 %v2916
    %3201 = vmatprep.mubr.bf16.mxu0 %v2255
    %3202 = vmatmul.mubr.bf16.gmra.mrb[0].mxu0 %v2254
    %v3203 = vpop.f32.mrb[0].mxu0
    %v3204 = vadd.f32 %v3163, %v3203
    %v3205 = vpop.f32.mrb[0].mxu0
    %v3206 = vadd.f32 %v3165, %v3205
    %v3207 = vpop.f32.mrb[0].mxu0
    %v3208 = vpop.f32.mrb[0].mxu0
    %3209 = vdwg.mxu0
    %v3210 = vxor.u32 %v3122, 2147483648
    %v3211 = vxor.u32 %v3124, 2147483648
    %v3212 = vxor.u32 %v3204, 2147483648
    %v3213 = vxor.u32 %v3206, 2147483648
    %v3214 = vmul.f32 %v3210, 1.442695
    %v3215 = vpow.pop %v3214
    %v3216 = vmul.f32 %v3211, 1.442695
    %v3217 = vpow.pop %v3216
    %v3218 = vmul.f32 %v3212, 1.442695
    %v3219 = vpow.pop %v3218
    %v3220 = vmul.f32 %v3213, 1.442695
    %v3221 = vpow.pop %v3220
    %v3222 = vadd.f32 %v3215, 1.0
    %v3223 = vadd.f32 %v3217, 1.0
    %v3224 = vadd.f32 %v3219, 1.0
    %v3225 = vadd.f32 %v3221, 1.0
    %v3226 = vrcp.pop %v3222
    %v3227 = vmul.f32 1.0, %v3226
    %v3228 = vrcp.pop %v3223
    %v3229 = vmul.f32 1.0, %v3228
    %v3230 = vrcp.pop %v3224
    %v3231 = vmul.f32 1.0, %v3230
    %v3232 = vrcp.pop %v3225
    %v3233 = vmul.f32 1.0, %v3232
    %v3234 = vmul.f32 %v3122, %v3227
    %v3235 = vmul.f32 %v3124, %v3229
    %v3236 = vmul.f32 %v3204, %v3231
    %v3237 = vmul.f32 %v3206, %v3233
    %v3238 = vpack.c.bf16 %v3234, %v3234
    %v3239 = vpack.c.bf16 %v3235, %v3235
    %v3240 = vpack.c.bf16 %v3236, %v3236
    %v3241 = vpack.c.bf16 %v3237, %v3237
    %v3242 = vld [vmem:[#allocation11] sm:$0xf]
    %v3243 = vld [vmem:[#allocation11 + $0x4] sm:$0xf]
    %v3244 = vld [vmem:[#allocation11 + $0x8] sm:$0xf]
    %v3245 = vld [vmem:[#allocation11 + $0xc] sm:$0xf]
    %v3246 = vld [vmem:[#allocation11 + $0x10] sm:$0xf]
    %v3247 = vld [vmem:[#allocation11 + $0x14] sm:$0xf]
    %v3248 = vld [vmem:[#allocation11 + $0x18] sm:$0xf]
    %v3249 = vld [vmem:[#allocation11 + $0x1c] sm:$0xf]
    %v3250 = vld [vmem:[#allocation11 + $0x20] sm:$0xf]
    %v3251 = vld [vmem:[#allocation11 + $0x24] sm:$0xf]
    %v3252 = vld [vmem:[#allocation11 + $0x28] sm:$0xf]
    %v3253 = vld [vmem:[#allocation11 + $0x2c] sm:$0xf]
    %v3254 = vld [vmem:[#allocation11 + $0x30] sm:$0xf]
    %v3255 = vld [vmem:[#allocation11 + $0x34] sm:$0xf]
    %v3256 = vld [vmem:[#allocation11 + $0x38] sm:$0xf]
    %v3257 = vld [vmem:[#allocation11 + $0x3c] sm:$0xf]
    %v3258 = vld [vmem:[#allocation11 + $0x40] sm:$0xf]
    %v3259 = vld [vmem:[#allocation11 + $0x44] sm:$0xf]
    %v3260 = vld [vmem:[#allocation11 + $0x48] sm:$0xf]
    %v3261 = vld [vmem:[#allocation11 + $0x4c] sm:$0xf]
    %v3262 = vld [vmem:[#allocation11 + $0x50] sm:$0xf]
    %v3263 = vld [vmem:[#allocation11 + $0x54] sm:$0xf]
    %v3264 = vld [vmem:[#allocation11 + $0x58] sm:$0xf]
    %v3265 = vld [vmem:[#allocation11 + $0x5c] sm:$0xf]
    %v3266 = vld [vmem:[#allocation11 + $0x60] sm:$0xf]
    %v3267 = vld [vmem:[#allocation11 + $0x64] sm:$0xf]
    %v3268 = vld [vmem:[#allocation11 + $0x68] sm:$0xf]
    %v3269 = vld [vmem:[#allocation11 + $0x6c] sm:$0xf]
    %v3270 = vld [vmem:[#allocation11 + $0x70] sm:$0xf]
    %v3271 = vld [vmem:[#allocation11 + $0x74] sm:$0xf]
    %v3272 = vld [vmem:[#allocation11 + $0x78] sm:$0xf]
    %v3273 = vld [vmem:[#allocation11 + $0x7c] sm:$0xf]
    %v3274 = vld [vmem:[#allocation11 + $0x80] sm:$0xf]
    %v3275 = vld [vmem:[#allocation11 + $0x84] sm:$0xf]
    %v3276 = vld [vmem:[#allocation11 + $0x88] sm:$0xf]
    %v3277 = vld [vmem:[#allocation11 + $0x8c] sm:$0xf]
    %v3278 = vld [vmem:[#allocation11 + $0x90] sm:$0xf]
    %v3279 = vld [vmem:[#allocation11 + $0x94] sm:$0xf]
    %v3280 = vld [vmem:[#allocation11 + $0x98] sm:$0xf]
    %v3281 = vld [vmem:[#allocation11 + $0x9c] sm:$0xf]
    %v3282 = vld [vmem:[#allocation11 + $0xa0] sm:$0xf]
    %v3283 = vld [vmem:[#allocation11 + $0xa4] sm:$0xf]
    %v3284 = vld [vmem:[#allocation11 + $0xa8] sm:$0xf]
    %v3285 = vld [vmem:[#allocation11 + $0xac] sm:$0xf]
    %v3286 = vld [vmem:[#allocation11 + $0xb0] sm:$0xf]
    %v3287 = vld [vmem:[#allocation11 + $0xb4] sm:$0xf]
    %v3288 = vld [vmem:[#allocation11 + $0xb8] sm:$0xf]
    %v3289 = vld [vmem:[#allocation11 + $0xbc] sm:$0xf]
    %v3290 = vld [vmem:[#allocation11 + $0xc0] sm:$0xf]
    %v3291 = vld [vmem:[#allocation11 + $0xc4] sm:$0xf]
    %v3292 = vld [vmem:[#allocation11 + $0xc8] sm:$0xf]
    %v3293 = vld [vmem:[#allocation11 + $0xcc] sm:$0xf]
    %v3294 = vld [vmem:[#allocation11 + $0xd0] sm:$0xf]
    %v3295 = vld [vmem:[#allocation11 + $0xd4] sm:$0xf]
    %v3296 = vld [vmem:[#allocation11 + $0xd8] sm:$0xf]
    %v3297 = vld [vmem:[#allocation11 + $0xdc] sm:$0xf]
    %v3298 = vld [vmem:[#allocation11 + $0xe0] sm:$0xf]
    %v3299 = vld [vmem:[#allocation11 + $0xe4] sm:$0xf]
    %v3300 = vld [vmem:[#allocation11 + $0xe8] sm:$0xf]
    %v3301 = vld [vmem:[#allocation11 + $0xec] sm:$0xf]
    %v3302 = vld [vmem:[#allocation11 + $0xf0] sm:$0xf]
    %v3303 = vld [vmem:[#allocation11 + $0xf4] sm:$0xf]
    %v3304 = vld [vmem:[#allocation11 + $0xf8] sm:$0xf]
    %v3305 = vld [vmem:[#allocation11 + $0xfc] sm:$0xf]
    %v3306 = vld [vmem:[%s10] sm:$0x1]
    %v3308 = vlaneseq
    %v3309 = vshrl.u32 %v3308, 7
    %v3310 = vsub.s32 0, %v3309
    %v3311 = vrot.slane %v3306, %v3310
    %v3377 = vunpack.c.l.b16 %v3242
    %v3378 = vunpack.c.l.b16 %v3243
    %v3379 = vunpack.c.l.b16 %v3244
    %v3380 = vunpack.c.l.b16 %v3245
    %v3381 = vunpack.c.l.b16 %v3246
    %v3382 = vunpack.c.l.b16 %v3247
    %v3383 = vunpack.c.l.b16 %v3248
    %v3384 = vunpack.c.l.b16 %v3249
    %v3385 = vunpack.c.l.b16 %v3250
    %v3386 = vunpack.c.l.b16 %v3251
    %v3387 = vunpack.c.l.b16 %v3252
    %v3388 = vunpack.c.l.b16 %v3253
    %v3389 = vunpack.c.l.b16 %v3254
    %v3390 = vunpack.c.l.b16 %v3255
    %v3391 = vunpack.c.l.b16 %v3256
    %v3392 = vunpack.c.l.b16 %v3257
    %v3393 = vunpack.c.l.b16 %v3258
    %v3394 = vunpack.c.l.b16 %v3259
    %v3395 = vunpack.c.l.b16 %v3260
    %v3396 = vunpack.c.l.b16 %v3261
    %v3397 = vunpack.c.l.b16 %v3262
    %v3398 = vunpack.c.l.b16 %v3263
    %v3399 = vunpack.c.l.b16 %v3264
    %v3400 = vunpack.c.l.b16 %v3265
    %v3401 = vunpack.c.l.b16 %v3266
    %v3402 = vunpack.c.l.b16 %v3267
    %v3403 = vunpack.c.l.b16 %v3268
    %v3404 = vunpack.c.l.b16 %v3269
    %v3405 = vunpack.c.l.b16 %v3270
    %v3406 = vunpack.c.l.b16 %v3271
    %v3407 = vunpack.c.l.b16 %v3272
    %v3408 = vunpack.c.l.b16 %v3273
    %v3409 = vunpack.c.l.b16 %v3274
    %v3410 = vunpack.c.l.b16 %v3275
    %v3411 = vunpack.c.l.b16 %v3276
    %v3412 = vunpack.c.l.b16 %v3277
    %v3413 = vunpack.c.l.b16 %v3278
    %v3414 = vunpack.c.l.b16 %v3279
    %v3415 = vunpack.c.l.b16 %v3280
    %v3416 = vunpack.c.l.b16 %v3281
    %v3417 = vunpack.c.l.b16 %v3282
    %v3418 = vunpack.c.l.b16 %v3283
    %v3419 = vunpack.c.l.b16 %v3284
    %v3420 = vunpack.c.l.b16 %v3285
    %v3421 = vunpack.c.l.b16 %v3286
    %v3422 = vunpack.c.l.b16 %v3287
    %v3423 = vunpack.c.l.b16 %v3288
    %v3424 = vunpack.c.l.b16 %v3289
    %v3425 = vunpack.c.l.b16 %v3290
    %v3426 = vunpack.c.l.b16 %v3291
    %v3427 = vunpack.c.l.b16 %v3292
    %v3428 = vunpack.c.l.b16 %v3293
    %v3429 = vunpack.c.l.b16 %v3294
    %v3430 = vunpack.c.l.b16 %v3295
    %v3431 = vunpack.c.l.b16 %v3296
    %v3432 = vunpack.c.l.b16 %v3297
    %v3433 = vunpack.c.l.b16 %v3298
    %v3434 = vunpack.c.l.b16 %v3299
    %v3435 = vunpack.c.l.b16 %v3300
    %v3436 = vunpack.c.l.b16 %v3301
    %v3437 = vunpack.c.l.b16 %v3302
    %v3438 = vunpack.c.l.b16 %v3303
    %v3439 = vunpack.c.l.b16 %v3304
    %v3440 = vunpack.c.l.b16 %v3305
    %v3441 = vpack.c.b16 %v3378, %v3377
    %v3442 = vpack.c.b16 %v3380, %v3379
    %v3443 = vpack.c.b16 %v3382, %v3381
    %v3444 = vpack.c.b16 %v3384, %v3383
    %v3445 = vpack.c.b16 %v3386, %v3385
    %v3446 = vpack.c.b16 %v3388, %v3387
    %v3447 = vpack.c.b16 %v3390, %v3389
    %v3448 = vpack.c.b16 %v3392, %v3391
    %v3449 = vpack.c.b16 %v3394, %v3393
    %v3450 = vpack.c.b16 %v3396, %v3395
    %v3451 = vpack.c.b16 %v3398, %v3397
    %v3452 = vpack.c.b16 %v3400, %v3399
    %v3453 = vpack.c.b16 %v3402, %v3401
    %v3454 = vpack.c.b16 %v3404, %v3403
    %v3455 = vpack.c.b16 %v3406, %v3405
    %v3456 = vpack.c.b16 %v3408, %v3407
    %v3457 = vpack.c.b16 %v3410, %v3409
    %v3458 = vpack.c.b16 %v3412, %v3411
    %v3459 = vpack.c.b16 %v3414, %v3413
    %v3460 = vpack.c.b16 %v3416, %v3415
    %v3461 = vpack.c.b16 %v3418, %v3417
    %v3462 = vpack.c.b16 %v3420, %v3419
    %v3463 = vpack.c.b16 %v3422, %v3421
    %v3464 = vpack.c.b16 %v3424, %v3423
    %v3465 = vpack.c.b16 %v3426, %v3425
    %v3466 = vpack.c.b16 %v3428, %v3427
    %v3467 = vpack.c.b16 %v3430, %v3429
    %v3468 = vpack.c.b16 %v3432, %v3431
    %v3469 = vpack.c.b16 %v3434, %v3433
    %v3470 = vpack.c.b16 %v3436, %v3435
    %v3471 = vpack.c.b16 %v3438, %v3437
    %v3472 = vpack.c.b16 %v3440, %v3439
    %3505 = vmatprep.subr.bf16.mxu0 0
    %3506 = vmatpush1.bf16.msra.mxu0 %v3441
    %3507 = vmatprep.subr.bf16.mxu0 0
    %3508 = vmatpush1.bf16.msra.mxu0 %v3442
    %3509 = vmatprep.subr.bf16.mxu0 0
    %3510 = vmatpush1.bf16.msra.mxu0 %v3443
    %3511 = vmatprep.subr.bf16.mxu0 0
    %3512 = vmatpush1.bf16.msra.mxu0 %v3444
    %3513 = vmatprep.subr.bf16.mxu0 0
    %3514 = vmatpush1.bf16.msra.mxu0 %v3445
    %3515 = vmatprep.subr.bf16.mxu0 0
    %3516 = vmatpush1.bf16.msra.mxu0 %v3446
    %3517 = vmatprep.subr.bf16.mxu0 0
    %3518 = vmatpush1.bf16.msra.mxu0 %v3447
    %3519 = vmatprep.subr.bf16.mxu0 0
    %3520 = vmatpush1.bf16.msra.mxu0 %v3448
    %3521 = vmatprep.subr.bf16.mxu0 0
    %3522 = vmatpush1.bf16.msra.mxu0 %v3449
    %3523 = vmatprep.subr.bf16.mxu0 0
    %3524 = vmatpush1.bf16.msra.mxu0 %v3450
    %3525 = vmatprep.subr.bf16.mxu0 0
    %3526 = vmatpush1.bf16.msra.mxu0 %v3451
    %3527 = vmatprep.subr.bf16.mxu0 0
    %3528 = vmatpush1.bf16.msra.mxu0 %v3452
    %3529 = vmatprep.subr.bf16.mxu0 0
    %3530 = vmatpush1.bf16.msra.mxu0 %v3453
    %3531 = vmatprep.subr.bf16.mxu0 0
    %3532 = vmatpush1.bf16.msra.mxu0 %v3454
    %3533 = vmatprep.subr.bf16.mxu0 0
    %3534 = vmatpush1.bf16.msra.mxu0 %v3455
    %3535 = vmatprep.subr.bf16.mxu0 0
    %3536 = vmatpush1.bf16.msra.mxu0 %v3456
    %3537 = vmatprep.mubr.bf16.mxu0 %v3239
    %3538 = vmatmul.mubr.bf16.gmra.mrb[0].mxu0 %v3238
    %v3539 = vpop.f32.mrb[0].mxu0
    %v3540 = vadd.f32 %v3311, %v3539
    %v3541 = vpop.f32.mrb[0].mxu0
    %v3542 = vpop.f32.mrb[0].mxu0
    %v3543 = vpop.f32.mrb[0].mxu0
    %3544 = vdwg.mxu0
    %3545 = vmatprep.subr.bf16.mxu0 0
    %3546 = vmatpush1.bf16.msra.mxu0 %v3457
    %3547 = vmatprep.subr.bf16.mxu0 0
    %3548 = vmatpush1.bf16.msra.mxu0 %v3458
    %3549 = vmatprep.subr.bf16.mxu0 0
    %3550 = vmatpush1.bf16.msra.mxu0 %v3459
    %3551 = vmatprep.subr.bf16.mxu0 0
    %3552 = vmatpush1.bf16.msra.mxu0 %v3460
    %3553 = vmatprep.subr.bf16.mxu0 0
    %3554 = vmatpush1.bf16.msra.mxu0 %v3461
    %3555 = vmatprep.subr.bf16.mxu0 0
    %3556 = vmatpush1.bf16.msra.mxu0 %v3462
    %3557 = vmatprep.subr.bf16.mxu0 0
    %3558 = vmatpush1.bf16.msra.mxu0 %v3463
    %3559 = vmatprep.subr.bf16.mxu0 0
    %3560 = vmatpush1.bf16.msra.mxu0 %v3464
    %3561 = vmatprep.subr.bf16.mxu0 0
    %3562 = vmatpush1.bf16.msra.mxu0 %v3465
    %3563 = vmatprep.subr.bf16.mxu0 0
    %3564 = vmatpush1.bf16.msra.mxu0 %v3466
    %3565 = vmatprep.subr.bf16.mxu0 0
    %3566 = vmatpush1.bf16.msra.mxu0 %v3467
    %3567 = vmatprep.subr.bf16.mxu0 0
    %3568 = vmatpush1.bf16.msra.mxu0 %v3468
    %3569 = vmatprep.subr.bf16.mxu0 0
    %3570 = vmatpush1.bf16.msra.mxu0 %v3469
    %3571 = vmatprep.subr.bf16.mxu0 0
    %3572 = vmatpush1.bf16.msra.mxu0 %v3470
    %3573 = vmatprep.subr.bf16.mxu0 0
    %3574 = vmatpush1.bf16.msra.mxu0 %v3471
    %3575 = vmatprep.subr.bf16.mxu0 0
    %3576 = vmatpush1.bf16.msra.mxu0 %v3472
    %3577 = vmatprep.mubr.bf16.mxu0 %v3241
    %3578 = vmatmul.mubr.bf16.gmra.mrb[0].mxu0 %v3240
    %v3579 = vpop.f32.mrb[0].mxu0
    %v3580 = vadd.f32 %v3540, %v3579
    %v3581 = vpop.f32.mrb[0].mxu0
    %v3582 = vpop.f32.mrb[0].mxu0
    %v3583 = vpop.f32.mrb[0].mxu0
    %3584 = vdwg.mxu0
    %3585 = vst [vmem:[#allocation13] sm:$0xff] %v3580
    // Predicated region
    $region70: #{tpu_custom_call.1} parent=1 // pred_check
      _
    $region71: #{tpu_custom_call.1} parent=1 // pred_check_branch
      %3587 = sbr.rel (0) target = $region73
    $region72: #{tpu_custom_call.1} parent=1 // pred_region
      %s3589 = ssub.s32 128, 128
      %3590 = vsyncadd [#allocation4], %s3589
      %s3592 = sshll.u32 [#allocation13], 4
      %s3593 = int_to_ptr.vmem [resolvable:$true] %s3592
      %3595 = dma.vmem_to_hbm [thread:$0]  %s3593, 128, %s11, [#allocation4]
    $region73: #{tpu_custom_call.1} parent=1 // pred_fallthru
      _
    // Predicated region
    $region74: #{tpu_custom_call.1} parent=1 // pred_check
      _
    $region75: #{tpu_custom_call.1} parent=1 // pred_check_branch
      %3597 = sbr.rel (0) target = $region77
    $region76: #{tpu_custom_call.1} parent=1 // pred_region
      %3598 = dma.done [#allocation4], 128
    $region77: #{tpu_custom_call.1} parent=1 // pred_fallthru
      _
    %3599 = vsyncpa [#allocation3], 1
    %3600 = vsyncpa [#allocation6], 1
    %3601 = vsyncpa [#allocation9], 1
    %3602 = vsyncpa [#allocation12], 1
    %3603 = vsyncpa [#allocation4], 1

</llo_original>
